<compile_context>
chip_gen: v6e
topology: v6e:2x2x1
jax: 0.10.0
libtpu: 0.0.40
codegen_flags: <defaults>
</compile_context>

<pallas_src>
import functools

import jax
import jax.numpy as jnp
from jax import lax
from jax.experimental import pallas as pl
from jax.experimental.pallas import tpu as pltpu


def _roll_lanes(v, s, size):
    """out[..., p] = v[..., (p + s) % size]  (s is a static Python int).

    Lowers to a single XLU `vrot` (vector-extended slot) instead of a
    concatenate of two lane slices, which crosses (8,128) vreg tiles and burns
    VALU + vld/vst slots.  Wrapped positions are always masked by the caller.
    """
    k = s % size
    if k == 0:
        return v
    return pltpu.roll(v, shift=(size - k) % size, axis=v.ndim - 1)


def attention_gate_kernel(x1_ref, x2_ref, w1_ref, b1_ref, w2_ref, b2_ref,
                          convw_ref, convb_ref, gamma_ref, out_ref, *, H, W):
    # x1_ref / x2_ref / out_ref: (Bt, C, H*W) VMEM (lane-dense)
    # w1: (2C, R), b1: (1, R), w2: (R, C), b2: (1, C)               VMEM
    # convw: (98,) = flattened (2, 7, 7), convb: (1,), gamma: (1,)  SMEM
    Bt, C, HW = x1_ref.shape

    # ---- reductions (consume the loads right away; the slabs are re-read
    #      from VMEM for the final combine, so they are not kept live across
    #      the conv) ----
    x1 = x1_ref[...]
    gap1 = jnp.mean(x1, axis=2)                 # (Bt, C)   lane reduce
    max1 = jnp.max(x1, axis=1)                  # (Bt, HW)  sublane reduce
    sum1 = jnp.sum(x1, axis=1)                  # (Bt, HW)
    x2 = x2_ref[...]
    gap2 = jnp.mean(x2, axis=2)
    max2 = jnp.max(x2, axis=1)
    sum2 = jnp.sum(x2, axis=1)

    maxp = jnp.maximum(max1, max2)              # channel-max of cat([x1, x2])
    avgp = (sum1 + sum2) * (0.5 / C)            # channel-mean of cat([x1, x2])

    # ---- channel attention: GAP -> Linear -> ReLU -> Linear -> sigmoid ----
    # These matmuls are tiny (K, N = 2..32); keep them as plain jnp.dot and do
    # NOT enlarge tiles "for the MXU" -- the real bottlenecks are HBM traffic
    # and the conv's VALU work.
    g = jnp.concatenate([gap1, gap2], axis=1)   # (Bt, 2C)
    h = jnp.maximum(
        jnp.dot(g, w1_ref[...], preferred_element_type=jnp.float32) + b1_ref[...],
        0.0)                                    # (Bt, R)
    cw = jax.nn.sigmoid(
        jnp.dot(h, w2_ref[...], preferred_element_type=jnp.float32) + b2_ref[...])  # (Bt, C)

    # ---- spatial attention: 7x7 conv (padding=3) on the flattened maps ----
    # out[p] = sum_{c,ky,kx} w[c,ky,kx] * plane_c[p + (ky-3)*W + (kx-3)],
    # taps outside the HxW image masked to zero.  Shifts are XLU rolls; the
    # boundary masks are single folded-constant compares, and the center taps
    # (dx == 0, dy == 0) need no mask / select at all.
    idx = lax.broadcasted_iota(jnp.int32, (Bt, HW), 1)
    if W & (W - 1) == 0:
        xcol = jnp.bitwise_and(idx, W - 1)      # p % W (W is a power of two)
    else:
        xcol = idx % W
    mask_x = {dx: (xcol < (W - dx)) if dx > 0 else (xcol >= (-dx))
              for dx in range(-3, 4) if dx != 0}
    mask_y = {dy: (idx < (HW - dy * W)) if dy > 0 else (idx >= (-dy * W))
              for dy in range(-3, 4) if dy != 0}

    acc = jnp.full((Bt, HW), convb_ref[0], dtype=jnp.float32)
    for c, plane in enumerate((maxp, avgp)):    # channel 0 = max, 1 = avg
        # column-shifted, column-masked copies (7 per plane; center unmasked)
        cols = []
        for kx in range(7):
            dx = kx - 3
            if dx == 0:
                cols.append(plane)
            else:
                cols.append(jnp.where(mask_x[dx], _roll_lanes(plane, dx, HW), 0.0))
        for ky in range(7):
            dy = ky - 3
            row = cols[0] * convw_ref[c * 49 + ky * 7]
            for kx in range(1, 7):
                row = row + cols[kx] * convw_ref[c * 49 + ky * 7 + kx]
            if dy == 0:
                acc = acc + row
            else:
                acc = acc + jnp.where(mask_y[dy],
                                      _roll_lanes(row, dy * W, HW), 0.0)
    sw = jax.nn.sigmoid(acc)                    # (Bt, HW)

    # ---- combine: out = x1 + gamma * (cw[b,c] * sw[b,p]) * x2 ----
    # gamma folded into cw.  The (Bt,C)->(Bt,C,1) reshape moves C from lanes
    # to sublanes; cheap at small C.  TODO(synk): if C grows to >=64, produce
    # cw sublane-major (pltpu.einshape / small VMEM scratch) instead.
    scale = (gamma_ref[0] * cw).reshape(Bt, C, 1)
    out_ref[...] = x1_ref[...] + (scale * sw.reshape(Bt, 1, HW)) * x2_ref[...]


def _vmem_budget_bytes():
    """Per-generation VMEM limit requested from the compiler (with headroom)."""
    try:
        phys = pltpu.get_tpu_info().vmem_capacity_bytes
    except Exception:
        phys = 64 << 20                         # conservative (v7x per-TC)
    # v7x: 64 MiB physical -> ~48 MiB; v5e/v6e: 128 MiB -> ~96 MiB.
    return int(min(phys * 3 // 4, 96 << 20))


def _is_multi_tensorcore():
    """True on chips with >1 TensorCore per chip (v7x)."""
    try:
        return "v7" in jax.devices()[0].device_kind.lower()
    except Exception:
        return False


def _pick_bt(B, C, HW, R, vmem_limit, multi_core):
    """Largest batch tile (preferring sublane-dense multiples of 8) whose
    double-buffered x1/x2/out blocks + conv intermediates fit the VMEM budget.
    On multi-TensorCore chips keep the grid length >= 2 whenever possible so
    the "parallel" batch axis can be sharded across both cores."""
    budget = int(0.8 * vmem_limit)
    params = (2 * C * R + R + R * C + C) * 4

    def fits(bt):
        block = bt * C * HW * 4
        interm = 12 * bt * HW * 4               # pooled planes, masks, cols, acc, sw
        return 6 * block + interm + params + (1 << 20) <= budget

    for cand in (16, 8, 4, 2, 1):
        if B % cand != 0 or not fits(cand):
            continue
        if multi_core and cand > 1 and B // cand < 2:
            continue                            # leave >=2 grid steps for 2 TCs
        return cand
    # TODO(synk): if even bt=1 blows VMEM (very large C*H*W), fall back to a
    # two-pass variant: a tiled reduction kernel (pl.when init/finalize VMEM
    # accumulators) producing cw (B,C) and sw (B,HW), then a pure elementwise
    # combine kernel.  It costs ~1.66x HBM traffic, so it stays a fallback.
    return 1


def attention_gate(x1, x2, w1, b1, w2, b2, convw, convb, gamma):
    B, C, H, W = x1.shape
    HW = H * W
    R = w1.shape[1]

    # Lane-dense views: last dim H*W.  (If H*W is not a multiple of 128 the
    # kernel stays correct but stores degrade to masked partial stores.)
    x1f = x1.reshape(B, C, HW)
    x2f = x2.reshape(B, C, HW)
    convw_flat = convw.reshape(-1)              # (2*7*7,) = (98,)

    vmem_limit = _vmem_budget_bytes()
    bt = _pick_bt(B, C, HW, R, vmem_limit, _is_multi_tensorcore())

    outf = pl.pallas_call(
        functools.partial(attention_gate_kernel, H=H, W=W),
        out_shape=jax.ShapeDtypeStruct((B, C, HW), jnp.float32),
        grid_spec=pltpu.PrefetchScalarGridSpec(
            num_scalar_prefetch=0,
            grid=(B // bt,),
            in_specs=[
                pl.BlockSpec((bt, C, HW), lambda b: (b, 0, 0)),     # x1
                pl.BlockSpec((bt, C, HW), lambda b: (b, 0, 0)),     # x2
                pl.BlockSpec((2 * C, R), lambda b: (0, 0)),         # w1
                pl.BlockSpec((1, R), lambda b: (0, 0)),             # b1
                pl.BlockSpec((R, C), lambda b: (0, 0)),             # w2
                pl.BlockSpec((1, C), lambda b: (0, 0)),             # b2
                pl.BlockSpec(memory_space=pltpu.MemorySpace.SMEM),  # conv w (flat)
                pl.BlockSpec(memory_space=pltpu.MemorySpace.SMEM),  # conv bias
                pl.BlockSpec(memory_space=pltpu.MemorySpace.SMEM),  # gamma
            ],
            out_specs=pl.BlockSpec((bt, C, HW), lambda b: (b, 0, 0)),
        ),
        compiler_params=pltpu.CompilerParams(
            dimension_semantics=("parallel",),   # independent batch tiles
            vmem_limit_bytes=vmem_limit),
    )(x1f, x2f, w1, b1, w2, b2, convw_flat, convb, gamma)
    return outf.reshape(B, C, H, W)


def attention_gate_reference(x1, x2, w1, b1, w2, b2, convw, convb, gamma):
    """Pure-JAX reference matching the PyTorch forward."""
    B, C, H, W = x1.shape
    gap1 = jnp.mean(x1, axis=(2, 3))
    gap2 = jnp.mean(x2, axis=(2, 3))
    g = jnp.concatenate([gap1, gap2], axis=1)
    h = jax.nn.relu(g @ w1 + b1)
    cw = jax.nn.sigmoid(h @ w2 + b2)                       # (B, C)
    cat = jnp.concatenate([x1, x2], axis=1)
    maxp = jnp.max(cat, axis=1, keepdims=True)
    avgp = jnp.mean(cat, axis=1, keepdims=True)
    pooled = jnp.concatenate([maxp, avgp], axis=1)         # (B, 2, H, W)
    conv = lax.conv_general_dilated(
        pooled, convw.reshape(1, 2, 7, 7), window_strides=(1, 1),
        padding=((3, 3), (3, 3)),
        dimension_numbers=("NCHW", "OIHW", "NCHW")) + convb.reshape(1, 1, 1, 1)
    sw = jax.nn.sigmoid(conv)                              # (B, 1, H, W)
    comb = cw[:, :, None, None] * sw
    return x1 + gamma[0] * (comb * x2)


if __name__ == "__main__":
    B, C, H, W = 2, 16, 16, 16
    R = C // 8  # reduction_ratio = 8

    key = jax.random.PRNGKey(0)
    ks = jax.random.split(key, 9)
    x1 = jax.random.normal(ks[0], (B, C, H, W), dtype=jnp.float32)
    x2 = jax.random.normal(ks[1], (B, C, H, W), dtype=jnp.float32)

    # Deterministic synthetic parameters (shapes from AttentionGate.__init__).
    w1 = jax.random.normal(ks[2], (2 * C, R), dtype=jnp.float32) * 0.2
    b1 = jax.random.normal(ks[3], (1, R), dtype=jnp.float32) * 0.1
    w2 = jax.random.normal(ks[4], (R, C), dtype=jnp.float32) * 0.2
    b2 = jax.random.normal(ks[5], (1, C), dtype=jnp.float32) * 0.1
    convw = jax.random.normal(ks[6], (2, 7, 7), dtype=jnp.float32) * 0.1
    convb = jax.random.normal(ks[7], (1,), dtype=jnp.float32) * 0.1
    gamma = jnp.array([0.5], dtype=jnp.float32)  # nonzero so the gated path is exercised
    # (module __init__ uses gamma = 0; kept nonzero here to test the full compute)

    out = attention_gate(x1, x2, w1, b1, w2, b2, convw, convb, gamma)
    out = jax.block_until_ready(out)

    ref = attention_gate_reference(x1, x2, w1, b1, w2, b2, convw, convb, gamma)
    err = float(jnp.max(jnp.abs(out - ref)))
    assert err < 1e-4, f"max abs error {err}"
    print("KERNEL_OK")
</pallas_src>

<mosaic_0001>
module attributes {stable_mosaic.version = 11 : i64} {
  func.func @attention_gate_kernel(%arg0: i32, %arg1: memref<2x16x256xf32, #tpu.memory_space<vmem>>, %arg2: memref<2x16x256xf32, #tpu.memory_space<vmem>>, %arg3: memref<32x2xf32, #tpu.memory_space<vmem>>, %arg4: memref<1x2xf32, #tpu.memory_space<vmem>>, %arg5: memref<2x16xf32, #tpu.memory_space<vmem>>, %arg6: memref<1x16xf32, #tpu.memory_space<vmem>>, %arg7: memref<98xf32, #tpu.memory_space<smem>>, %arg8: memref<1xf32, #tpu.memory_space<smem>>, %arg9: memref<1xf32, #tpu.memory_space<smem>>, %arg10: memref<2x16x256xf32, #tpu.memory_space<vmem>>) attributes {dimension_semantics = [#tpu.dimension_semantics<parallel>], iteration_bounds = array<i64: 1>, scalar_prefetch = 0 : i64, scratch_operands = 0 : i64, tpu.core_type = #tpu.core_type<tc>, window_params = [{transform_indices = @transform_0, window_bounds = array<i64: 2, 16, 256>}, {transform_indices = @transform_1, window_bounds = array<i64: 2, 16, 256>}, {pipeline_mode = #tpu.pipeline_mode<synchronous>, transform_indices = @transform_2, window_bounds = array<i64: 32, 2>}, {pipeline_mode = #tpu.pipeline_mode<synchronous>, transform_indices = @transform_3, window_bounds = array<i64: 1, 2>}, {pipeline_mode = #tpu.pipeline_mode<synchronous>, transform_indices = @transform_4, window_bounds = array<i64: 2, 16>}, {pipeline_mode = #tpu.pipeline_mode<synchronous>, transform_indices = @transform_5, window_bounds = array<i64: 1, 16>}, {transform_indices = @transform_6, window_bounds = array<i64: 98>}, {transform_indices = @transform_7, window_bounds = array<i64: 1>}, {transform_indices = @transform_8, window_bounds = array<i64: 1>}, {transform_indices = @transform_9, window_bounds = array<i64: 2, 16, 256>}]} {
    %c0 = arith.constant 0 : index
    %c0_0 = arith.constant 0 : index
    %c0_1 = arith.constant 0 : index
    %0 = vector.load %arg1[%c0, %c0_0, %c0_1] : memref<2x16x256xf32, #tpu.memory_space<vmem>>, vector<2x16x256xf32>
    %cst = arith.constant dense<0.000000e+00> : vector<2x16xf32>
    %1 = vector.multi_reduction <add>, %0, %cst [2] : vector<2x16x256xf32> to vector<2x16xf32>
    %cst_2 = arith.constant 2.560000e+02 : f32
    %2 = vector.broadcast %cst_2 : f32 to vector<2x16xf32>
    %3 = arith.divf %1, %2 : vector<2x16xf32>
    %cst_3 = arith.constant dense<0xFF800000> : vector<2x256xf32>
    %4 = vector.multi_reduction <maximumf>, %0, %cst_3 [1] : vector<2x16x256xf32> to vector<2x256xf32>
    %cst_4 = arith.constant dense<0.000000e+00> : vector<2x256xf32>
    %5 = vector.multi_reduction <add>, %0, %cst_4 [1] : vector<2x16x256xf32> to vector<2x256xf32>
    %c0_5 = arith.constant 0 : index
    %c0_6 = arith.constant 0 : index
    %c0_7 = arith.constant 0 : index
    %6 = vector.load %arg2[%c0_5, %c0_6, %c0_7] : memref<2x16x256xf32, #tpu.memory_space<vmem>>, vector<2x16x256xf32>
    %cst_8 = arith.constant dense<0.000000e+00> : vector<2x16xf32>
    %7 = vector.multi_reduction <add>, %6, %cst_8 [2] : vector<2x16x256xf32> to vector<2x16xf32>
    %cst_9 = arith.constant 2.560000e+02 : f32
    %8 = vector.broadcast %cst_9 : f32 to vector<2x16xf32>
    %9 = arith.divf %7, %8 : vector<2x16xf32>
    %cst_10 = arith.constant dense<0xFF800000> : vector<2x256xf32>
    %10 = vector.multi_reduction <maximumf>, %6, %cst_10 [1] : vector<2x16x256xf32> to vector<2x256xf32>
    %cst_11 = arith.constant dense<0.000000e+00> : vector<2x256xf32>
    %11 = vector.multi_reduction <add>, %6, %cst_11 [1] : vector<2x16x256xf32> to vector<2x256xf32>
    %12 = arith.maximumf %4, %10 : vector<2x256xf32>
    %13 = arith.addf %5, %11 : vector<2x256xf32>
    %cst_12 = arith.constant 3.125000e-02 : f32
    %14 = vector.broadcast %cst_12 : f32 to vector<2x256xf32>
    %15 = arith.mulf %13, %14 : vector<2x256xf32>
    %16 = tpu.concatenate %3, %9 in 1 : vector<2x16xf32>, vector<2x16xf32> -> vector<2x32xf32>
    %c0_13 = arith.constant 0 : index
    %c0_14 = arith.constant 0 : index
    %17 = vector.load %arg3[%c0_13, %c0_14] : memref<32x2xf32, #tpu.memory_space<vmem>>, vector<32x2xf32>
    %cst_15 = arith.constant dense<0.000000e+00> : vector<2x2xf32>
    %18 = tpu.matmul %16, %17, %cst_15 {dimension_numbers = #tpu.dot_dimension_numbers<[1], [0], [0], [1], [0, 0, 1, 1], [], []>} : vector<2x32xf32>, vector<32x2xf32>, vector<2x2xf32> -> vector<2x2xf32>
    %c0_16 = arith.constant 0 : index
    %c0_17 = arith.constant 0 : index
    %19 = vector.load %arg4[%c0_16, %c0_17] : memref<1x2xf32, #tpu.memory_space<vmem>>, vector<1x2xf32>
    %20 = vector.broadcast %19 : vector<1x2xf32> to vector<2x2xf32>
    %21 = arith.addf %18, %20 : vector<2x2xf32>
    %cst_18 = arith.constant 0.000000e+00 : f32
    %22 = vector.broadcast %cst_18 : f32 to vector<2x2xf32>
    %23 = arith.maximumf %21, %22 : vector<2x2xf32>
    %c0_19 = arith.constant 0 : index
    %c0_20 = arith.constant 0 : index
    %24 = vector.load %arg5[%c0_19, %c0_20] : memref<2x16xf32, #tpu.memory_space<vmem>>, vector<2x16xf32>
    %cst_21 = arith.constant dense<0.000000e+00> : vector<2x16xf32>
    %25 = tpu.matmul %23, %24, %cst_21 {dimension_numbers = #tpu.dot_dimension_numbers<[1], [0], [0], [1], [0, 0, 1, 1], [], []>} : vector<2x2xf32>, vector<2x16xf32>, vector<2x16xf32> -> vector<2x16xf32>
    %c0_22 = arith.constant 0 : index
    %c0_23 = arith.constant 0 : index
    %26 = vector.load %arg6[%c0_22, %c0_23] : memref<1x16xf32, #tpu.memory_space<vmem>>, vector<1x16xf32>
    %27 = vector.broadcast %26 : vector<1x16xf32> to vector<2x16xf32>
    %28 = arith.addf %25, %27 : vector<2x16xf32>
    %29 = arith.negf %28 : vector<2x16xf32>
    %30 = math.exp %29 : vector<2x16xf32>
    %cst_24 = arith.constant 1.000000e+00 : f32
    %31 = vector.broadcast %cst_24 : f32 to vector<2x16xf32>
    %32 = arith.addf %31, %30 : vector<2x16xf32>
    %33 = arith.divf %31, %32 : vector<2x16xf32>
    %34 = tpu.iota {dimensions = array<i32: 1>} : vector<2x256xi32>
    %c15_i32 = arith.constant 15 : i32
    %35 = vector.broadcast %c15_i32 : i32 to vector<2x256xi32>
    %36 = arith.andi %34, %35 : vector<2x256xi32>
    %c3_i32 = arith.constant 3 : i32
    %37 = vector.broadcast %c3_i32 : i32 to vector<2x256xi32>
    %38 = arith.cmpi sge, %36, %37 : vector<2x256xi32>
    %c2_i32 = arith.constant 2 : i32
    %39 = vector.broadcast %c2_i32 : i32 to vector<2x256xi32>
    %40 = arith.cmpi sge, %36, %39 : vector<2x256xi32>
    %c1_i32 = arith.constant 1 : i32
    %41 = vector.broadcast %c1_i32 : i32 to vector<2x256xi32>
    %42 = arith.cmpi sge, %36, %41 : vector<2x256xi32>
    %c15_i32_25 = arith.constant 15 : i32
    %43 = vector.broadcast %c15_i32_25 : i32 to vector<2x256xi32>
    %44 = arith.cmpi slt, %36, %43 : vector<2x256xi32>
    %c14_i32 = arith.constant 14 : i32
    %45 = vector.broadcast %c14_i32 : i32 to vector<2x256xi32>
    %46 = arith.cmpi slt, %36, %45 : vector<2x256xi32>
    %c13_i32 = arith.constant 13 : i32
    %47 = vector.broadcast %c13_i32 : i32 to vector<2x256xi32>
    %48 = arith.cmpi slt, %36, %47 : vector<2x256xi32>
    %c48_i32 = arith.constant 48 : i32
    %49 = vector.broadcast %c48_i32 : i32 to vector<2x256xi32>
    %50 = arith.cmpi sge, %34, %49 : vector<2x256xi32>
    %c32_i32 = arith.constant 32 : i32
    %51 = vector.broadcast %c32_i32 : i32 to vector<2x256xi32>
    %52 = arith.cmpi sge, %34, %51 : vector<2x256xi32>
    %c16_i32 = arith.constant 16 : i32
    %53 = vector.broadcast %c16_i32 : i32 to vector<2x256xi32>
    %54 = arith.cmpi sge, %34, %53 : vector<2x256xi32>
    %c240_i32 = arith.constant 240 : i32
    %55 = vector.broadcast %c240_i32 : i32 to vector<2x256xi32>
    %56 = arith.cmpi slt, %34, %55 : vector<2x256xi32>
    %c224_i32 = arith.constant 224 : i32
    %57 = vector.broadcast %c224_i32 : i32 to vector<2x256xi32>
    %58 = arith.cmpi slt, %34, %57 : vector<2x256xi32>
    %c208_i32 = arith.constant 208 : i32
    %59 = vector.broadcast %c208_i32 : i32 to vector<2x256xi32>
    %60 = arith.cmpi slt, %34, %59 : vector<2x256xi32>
    %c0_26 = arith.constant 0 : index
    %61 = memref.load %arg8[%c0_26] : memref<1xf32, #tpu.memory_space<smem>>
    %62 = vector.broadcast %61 : f32 to vector<2x256xf32>
    %c3_i32_27 = arith.constant 3 : i32
    %63 = tpu.dynamic_rotate %12 by %c3_i32_27 dim 1 : vector<2x256xf32>, i32 -> vector<2x256xf32>
    %cst_28 = arith.constant 0.000000e+00 : f32
    %64 = vector.broadcast %cst_28 : f32 to vector<2x256xf32>
    %65 = arith.select %38, %63, %64 : vector<2x256xi1>, vector<2x256xf32>
    %c2_i32_29 = arith.constant 2 : i32
    %66 = tpu.dynamic_rotate %12 by %c2_i32_29 dim 1 : vector<2x256xf32>, i32 -> vector<2x256xf32>
    %cst_30 = arith.constant 0.000000e+00 : f32
    %67 = vector.broadcast %cst_30 : f32 to vector<2x256xf32>
    %68 = arith.select %40, %66, %67 : vector<2x256xi1>, vector<2x256xf32>
    %c1_i32_31 = arith.constant 1 : i32
    %69 = tpu.dynamic_rotate %12 by %c1_i32_31 dim 1 : vector<2x256xf32>, i32 -> vector<2x256xf32>
    %cst_32 = arith.constant 0.000000e+00 : f32
    %70 = vector.broadcast %cst_32 : f32 to vector<2x256xf32>
    %71 = arith.select %42, %69, %70 : vector<2x256xi1>, vector<2x256xf32>
    %c255_i32 = arith.constant 255 : i32
    %72 = tpu.dynamic_rotate %12 by %c255_i32 dim 1 : vector<2x256xf32>, i32 -> vector<2x256xf32>
    %cst_33 = arith.constant 0.000000e+00 : f32
    %73 = vector.broadcast %cst_33 : f32 to vector<2x256xf32>
    %74 = arith.select %44, %72, %73 : vector<2x256xi1>, vector<2x256xf32>
    %c254_i32 = arith.constant 254 : i32
    %75 = tpu.dynamic_rotate %12 by %c254_i32 dim 1 : vector<2x256xf32>, i32 -> vector<2x256xf32>
    %cst_34 = arith.constant 0.000000e+00 : f32
    %76 = vector.broadcast %cst_34 : f32 to vector<2x256xf32>
    %77 = arith.select %46, %75, %76 : vector<2x256xi1>, vector<2x256xf32>
    %c253_i32 = arith.constant 253 : i32
    %78 = tpu.dynamic_rotate %12 by %c253_i32 dim 1 : vector<2x256xf32>, i32 -> vector<2x256xf32>
    %cst_35 = arith.constant 0.000000e+00 : f32
    %79 = vector.broadcast %cst_35 : f32 to vector<2x256xf32>
    %80 = arith.select %48, %78, %79 : vector<2x256xi1>, vector<2x256xf32>
    %c0_36 = arith.constant 0 : index
    %81 = memref.load %arg7[%c0_36] : memref<98xf32, #tpu.memory_space<smem>>
    %82 = vector.broadcast %81 : f32 to vector<2x256xf32>
    %83 = arith.mulf %65, %82 : vector<2x256xf32>
    %c1 = arith.constant 1 : index
    %84 = memref.load %arg7[%c1] : memref<98xf32, #tpu.memory_space<smem>>
    %85 = vector.broadcast %84 : f32 to vector<2x256xf32>
    %86 = arith.mulf %68, %85 : vector<2x256xf32>
    %87 = arith.addf %83, %86 : vector<2x256xf32>
    %c2 = arith.constant 2 : index
    %88 = memref.load %arg7[%c2] : memref<98xf32, #tpu.memory_space<smem>>
    %89 = vector.broadcast %88 : f32 to vector<2x256xf32>
    %90 = arith.mulf %71, %89 : vector<2x256xf32>
    %91 = arith.addf %87, %90 : vector<2x256xf32>
    %c3 = arith.constant 3 : index
    %92 = memref.load %arg7[%c3] : memref<98xf32, #tpu.memory_space<smem>>
    %93 = vector.broadcast %92 : f32 to vector<2x256xf32>
    %94 = arith.mulf %12, %93 : vector<2x256xf32>
    %95 = arith.addf %91, %94 : vector<2x256xf32>
    %c4 = arith.constant 4 : index
    %96 = memref.load %arg7[%c4] : memref<98xf32, #tpu.memory_space<smem>>
    %97 = vector.broadcast %96 : f32 to vector<2x256xf32>
    %98 = arith.mulf %74, %97 : vector<2x256xf32>
    %99 = arith.addf %95, %98 : vector<2x256xf32>
    %c5 = arith.constant 5 : index
    %100 = memref.load %arg7[%c5] : memref<98xf32, #tpu.memory_space<smem>>
    %101 = vector.broadcast %100 : f32 to vector<2x256xf32>
    %102 = arith.mulf %77, %101 : vector<2x256xf32>
    %103 = arith.addf %99, %102 : vector<2x256xf32>
    %c6 = arith.constant 6 : index
    %104 = memref.load %arg7[%c6] : memref<98xf32, #tpu.memory_space<smem>>
    %105 = vector.broadcast %104 : f32 to vector<2x256xf32>
    %106 = arith.mulf %80, %105 : vector<2x256xf32>
    %107 = arith.addf %103, %106 : vector<2x256xf32>
    %c48_i32_37 = arith.constant 48 : i32
    %108 = tpu.dynamic_rotate %107 by %c48_i32_37 dim 1 : vector<2x256xf32>, i32 -> vector<2x256xf32>
    %cst_38 = arith.constant 0.000000e+00 : f32
    %109 = vector.broadcast %cst_38 : f32 to vector<2x256xf32>
    %110 = arith.select %50, %108, %109 : vector<2x256xi1>, vector<2x256xf32>
    %111 = arith.addf %62, %110 : vector<2x256xf32>
    %c7 = arith.constant 7 : index
    %112 = memref.load %arg7[%c7] : memref<98xf32, #tpu.memory_space<smem>>
    %113 = vector.broadcast %112 : f32 to vector<2x256xf32>
    %114 = arith.mulf %65, %113 : vector<2x256xf32>
    %c8 = arith.constant 8 : index
    %115 = memref.load %arg7[%c8] : memref<98xf32, #tpu.memory_space<smem>>
    %116 = vector.broadcast %115 : f32 to vector<2x256xf32>
    %117 = arith.mulf %68, %116 : vector<2x256xf32>
    %118 = arith.addf %114, %117 : vector<2x256xf32>
    %c9 = arith.constant 9 : index
    %119 = memref.load %arg7[%c9] : memref<98xf32, #tpu.memory_space<smem>>
    %120 = vector.broadcast %119 : f32 to vector<2x256xf32>
    %121 = arith.mulf %71, %120 : vector<2x256xf32>
    %122 = arith.addf %118, %121 : vector<2x256xf32>
    %c10 = arith.constant 10 : index
    %123 = memref.load %arg7[%c10] : memref<98xf32, #tpu.memory_space<smem>>
    %124 = vector.broadcast %123 : f32 to vector<2x256xf32>
    %125 = arith.mulf %12, %124 : vector<2x256xf32>
    %126 = arith.addf %122, %125 : vector<2x256xf32>
    %c11 = arith.constant 11 : index
    %127 = memref.load %arg7[%c11] : memref<98xf32, #tpu.memory_space<smem>>
    %128 = vector.broadcast %127 : f32 to vector<2x256xf32>
    %129 = arith.mulf %74, %128 : vector<2x256xf32>
    %130 = arith.addf %126, %129 : vector<2x256xf32>
    %c12 = arith.constant 12 : index
    %131 = memref.load %arg7[%c12] : memref<98xf32, #tpu.memory_space<smem>>
    %132 = vector.broadcast %131 : f32 to vector<2x256xf32>
    %133 = arith.mulf %77, %132 : vector<2x256xf32>
    %134 = arith.addf %130, %133 : vector<2x256xf32>
    %c13 = arith.constant 13 : index
    %135 = memref.load %arg7[%c13] : memref<98xf32, #tpu.memory_space<smem>>
    %136 = vector.broadcast %135 : f32 to vector<2x256xf32>
    %137 = arith.mulf %80, %136 : vector<2x256xf32>
    %138 = arith.addf %134, %137 : vector<2x256xf32>
    %c32_i32_39 = arith.constant 32 : i32
    %139 = tpu.dynamic_rotate %138 by %c32_i32_39 dim 1 : vector<2x256xf32>, i32 -> vector<2x256xf32>
    %cst_40 = arith.constant 0.000000e+00 : f32
    %140 = vector.broadcast %cst_40 : f32 to vector<2x256xf32>
    %141 = arith.select %52, %139, %140 : vector<2x256xi1>, vector<2x256xf32>
    %142 = arith.addf %111, %141 : vector<2x256xf32>
    %c14 = arith.constant 14 : index
    %143 = memref.load %arg7[%c14] : memref<98xf32, #tpu.memory_space<smem>>
    %144 = vector.broadcast %143 : f32 to vector<2x256xf32>
    %145 = arith.mulf %65, %144 : vector<2x256xf32>
    %c15 = arith.constant 15 : index
    %146 = memref.load %arg7[%c15] : memref<98xf32, #tpu.memory_space<smem>>
    %147 = vector.broadcast %146 : f32 to vector<2x256xf32>
    %148 = arith.mulf %68, %147 : vector<2x256xf32>
    %149 = arith.addf %145, %148 : vector<2x256xf32>
    %c16 = arith.constant 16 : index
    %150 = memref.load %arg7[%c16] : memref<98xf32, #tpu.memory_space<smem>>
    %151 = vector.broadcast %150 : f32 to vector<2x256xf32>
    %152 = arith.mulf %71, %151 : vector<2x256xf32>
    %153 = arith.addf %149, %152 : vector<2x256xf32>
    %c17 = arith.constant 17 : index
    %154 = memref.load %arg7[%c17] : memref<98xf32, #tpu.memory_space<smem>>
    %155 = vector.broadcast %154 : f32 to vector<2x256xf32>
    %156 = arith.mulf %12, %155 : vector<2x256xf32>
    %157 = arith.addf %153, %156 : vector<2x256xf32>
    %c18 = arith.constant 18 : index
    %158 = memref.load %arg7[%c18] : memref<98xf32, #tpu.memory_space<smem>>
    %159 = vector.broadcast %158 : f32 to vector<2x256xf32>
    %160 = arith.mulf %74, %159 : vector<2x256xf32>
    %161 = arith.addf %157, %160 : vector<2x256xf32>
    %c19 = arith.constant 19 : index
    %162 = memref.load %arg7[%c19] : memref<98xf32, #tpu.memory_space<smem>>
    %163 = vector.broadcast %162 : f32 to vector<2x256xf32>
    %164 = arith.mulf %77, %163 : vector<2x256xf32>
    %165 = arith.addf %161, %164 : vector<2x256xf32>
    %c20 = arith.constant 20 : index
    %166 = memref.load %arg7[%c20] : memref<98xf32, #tpu.memory_space<smem>>
    %167 = vector.broadcast %166 : f32 to vector<2x256xf32>
    %168 = arith.mulf %80, %167 : vector<2x256xf32>
    %169 = arith.addf %165, %168 : vector<2x256xf32>
    %c16_i32_41 = arith.constant 16 : i32
    %170 = tpu.dynamic_rotate %169 by %c16_i32_41 dim 1 : vector<2x256xf32>, i32 -> vector<2x256xf32>
    %cst_42 = arith.constant 0.000000e+00 : f32
    %171 = vector.broadcast %cst_42 : f32 to vector<2x256xf32>
    %172 = arith.select %54, %170, %171 : vector<2x256xi1>, vector<2x256xf32>
    %173 = arith.addf %142, %172 : vector<2x256xf32>
    %c21 = arith.constant 21 : index
    %174 = memref.load %arg7[%c21] : memref<98xf32, #tpu.memory_space<smem>>
    %175 = vector.broadcast %174 : f32 to vector<2x256xf32>
    %176 = arith.mulf %65, %175 : vector<2x256xf32>
    %c22 = arith.constant 22 : index
    %177 = memref.load %arg7[%c22] : memref<98xf32, #tpu.memory_space<smem>>
    %178 = vector.broadcast %177 : f32 to vector<2x256xf32>
    %179 = arith.mulf %68, %178 : vector<2x256xf32>
    %180 = arith.addf %176, %179 : vector<2x256xf32>
    %c23 = arith.constant 23 : index
    %181 = memref.load %arg7[%c23] : memref<98xf32, #tpu.memory_space<smem>>
    %182 = vector.broadcast %181 : f32 to vector<2x256xf32>
    %183 = arith.mulf %71, %182 : vector<2x256xf32>
    %184 = arith.addf %180, %183 : vector<2x256xf32>
    %c24 = arith.constant 24 : index
    %185 = memref.load %arg7[%c24] : memref<98xf32, #tpu.memory_space<smem>>
    %186 = vector.broadcast %185 : f32 to vector<2x256xf32>
    %187 = arith.mulf %12, %186 : vector<2x256xf32>
    %188 = arith.addf %184, %187 : vector<2x256xf32>
    %c25 = arith.constant 25 : index
    %189 = memref.load %arg7[%c25] : memref<98xf32, #tpu.memory_space<smem>>
    %190 = vector.broadcast %189 : f32 to vector<2x256xf32>
    %191 = arith.mulf %74, %190 : vector<2x256xf32>
    %192 = arith.addf %188, %191 : vector<2x256xf32>
    %c26 = arith.constant 26 : index
    %193 = memref.load %arg7[%c26] : memref<98xf32, #tpu.memory_space<smem>>
    %194 = vector.broadcast %193 : f32 to vector<2x256xf32>
    %195 = arith.mulf %77, %194 : vector<2x256xf32>
    %196 = arith.addf %192, %195 : vector<2x256xf32>
    %c27 = arith.constant 27 : index
    %197 = memref.load %arg7[%c27] : memref<98xf32, #tpu.memory_space<smem>>
    %198 = vector.broadcast %197 : f32 to vector<2x256xf32>
    %199 = arith.mulf %80, %198 : vector<2x256xf32>
    %200 = arith.addf %196, %199 : vector<2x256xf32>
    %201 = arith.addf %173, %200 : vector<2x256xf32>
    %c28 = arith.constant 28 : index
    %202 = memref.load %arg7[%c28] : memref<98xf32, #tpu.memory_space<smem>>
    %203 = vector.broadcast %202 : f32 to vector<2x256xf32>
    %204 = arith.mulf %65, %203 : vector<2x256xf32>
    %c29 = arith.constant 29 : index
    %205 = memref.load %arg7[%c29] : memref<98xf32, #tpu.memory_space<smem>>
    %206 = vector.broadcast %205 : f32 to vector<2x256xf32>
    %207 = arith.mulf %68, %206 : vector<2x256xf32>
    %208 = arith.addf %204, %207 : vector<2x256xf32>
    %c30 = arith.constant 30 : index
    %209 = memref.load %arg7[%c30] : memref<98xf32, #tpu.memory_space<smem>>
    %210 = vector.broadcast %209 : f32 to vector<2x256xf32>
    %211 = arith.mulf %71, %210 : vector<2x256xf32>
    %212 = arith.addf %208, %211 : vector<2x256xf32>
    %c31 = arith.constant 31 : index
    %213 = memref.load %arg7[%c31] : memref<98xf32, #tpu.memory_space<smem>>
    %214 = vector.broadcast %213 : f32 to vector<2x256xf32>
    %215 = arith.mulf %12, %214 : vector<2x256xf32>
    %216 = arith.addf %212, %215 : vector<2x256xf32>
    %c32 = arith.constant 32 : index
    %217 = memref.load %arg7[%c32] : memref<98xf32, #tpu.memory_space<smem>>
    %218 = vector.broadcast %217 : f32 to vector<2x256xf32>
    %219 = arith.mulf %74, %218 : vector<2x256xf32>
    %220 = arith.addf %216, %219 : vector<2x256xf32>
    %c33 = arith.constant 33 : index
    %221 = memref.load %arg7[%c33] : memref<98xf32, #tpu.memory_space<smem>>
    %222 = vector.broadcast %221 : f32 to vector<2x256xf32>
    %223 = arith.mulf %77, %222 : vector<2x256xf32>
    %224 = arith.addf %220, %223 : vector<2x256xf32>
    %c34 = arith.constant 34 : index
    %225 = memref.load %arg7[%c34] : memref<98xf32, #tpu.memory_space<smem>>
    %226 = vector.broadcast %225 : f32 to vector<2x256xf32>
    %227 = arith.mulf %80, %226 : vector<2x256xf32>
    %228 = arith.addf %224, %227 : vector<2x256xf32>
    %c240_i32_43 = arith.constant 240 : i32
    %229 = tpu.dynamic_rotate %228 by %c240_i32_43 dim 1 : vector<2x256xf32>, i32 -> vector<2x256xf32>
    %cst_44 = arith.constant 0.000000e+00 : f32
    %230 = vector.broadcast %cst_44 : f32 to vector<2x256xf32>
    %231 = arith.select %56, %229, %230 : vector<2x256xi1>, vector<2x256xf32>
    %232 = arith.addf %201, %231 : vector<2x256xf32>
    %c35 = arith.constant 35 : index
    %233 = memref.load %arg7[%c35] : memref<98xf32, #tpu.memory_space<smem>>
    %234 = vector.broadcast %233 : f32 to vector<2x256xf32>
    %235 = arith.mulf %65, %234 : vector<2x256xf32>
    %c36 = arith.constant 36 : index
    %236 = memref.load %arg7[%c36] : memref<98xf32, #tpu.memory_space<smem>>
    %237 = vector.broadcast %236 : f32 to vector<2x256xf32>
    %238 = arith.mulf %68, %237 : vector<2x256xf32>
    %239 = arith.addf %235, %238 : vector<2x256xf32>
    %c37 = arith.constant 37 : index
    %240 = memref.load %arg7[%c37] : memref<98xf32, #tpu.memory_space<smem>>
    %241 = vector.broadcast %240 : f32 to vector<2x256xf32>
    %242 = arith.mulf %71, %241 : vector<2x256xf32>
    %243 = arith.addf %239, %242 : vector<2x256xf32>
    %c38 = arith.constant 38 : index
    %244 = memref.load %arg7[%c38] : memref<98xf32, #tpu.memory_space<smem>>
    %245 = vector.broadcast %244 : f32 to vector<2x256xf32>
    %246 = arith.mulf %12, %245 : vector<2x256xf32>
    %247 = arith.addf %243, %246 : vector<2x256xf32>
    %c39 = arith.constant 39 : index
    %248 = memref.load %arg7[%c39] : memref<98xf32, #tpu.memory_space<smem>>
    %249 = vector.broadcast %248 : f32 to vector<2x256xf32>
    %250 = arith.mulf %74, %249 : vector<2x256xf32>
    %251 = arith.addf %247, %250 : vector<2x256xf32>
    %c40 = arith.constant 40 : index
    %252 = memref.load %arg7[%c40] : memref<98xf32, #tpu.memory_space<smem>>
    %253 = vector.broadcast %252 : f32 to vector<2x256xf32>
    %254 = arith.mulf %77, %253 : vector<2x256xf32>
    %255 = arith.addf %251, %254 : vector<2x256xf32>
    %c41 = arith.constant 41 : index
    %256 = memref.load %arg7[%c41] : memref<98xf32, #tpu.memory_space<smem>>
    %257 = vector.broadcast %256 : f32 to vector<2x256xf32>
    %258 = arith.mulf %80, %257 : vector<2x256xf32>
    %259 = arith.addf %255, %258 : vector<2x256xf32>
    %c224_i32_45 = arith.constant 224 : i32
    %260 = tpu.dynamic_rotate %259 by %c224_i32_45 dim 1 : vector<2x256xf32>, i32 -> vector<2x256xf32>
    %cst_46 = arith.constant 0.000000e+00 : f32
    %261 = vector.broadcast %cst_46 : f32 to vector<2x256xf32>
    %262 = arith.select %58, %260, %261 : vector<2x256xi1>, vector<2x256xf32>
    %263 = arith.addf %232, %262 : vector<2x256xf32>
    %c42 = arith.constant 42 : index
    %264 = memref.load %arg7[%c42] : memref<98xf32, #tpu.memory_space<smem>>
    %265 = vector.broadcast %264 : f32 to vector<2x256xf32>
    %266 = arith.mulf %65, %265 : vector<2x256xf32>
    %c43 = arith.constant 43 : index
    %267 = memref.load %arg7[%c43] : memref<98xf32, #tpu.memory_space<smem>>
    %268 = vector.broadcast %267 : f32 to vector<2x256xf32>
    %269 = arith.mulf %68, %268 : vector<2x256xf32>
    %270 = arith.addf %266, %269 : vector<2x256xf32>
    %c44 = arith.constant 44 : index
    %271 = memref.load %arg7[%c44] : memref<98xf32, #tpu.memory_space<smem>>
    %272 = vector.broadcast %271 : f32 to vector<2x256xf32>
    %273 = arith.mulf %71, %272 : vector<2x256xf32>
    %274 = arith.addf %270, %273 : vector<2x256xf32>
    %c45 = arith.constant 45 : index
    %275 = memref.load %arg7[%c45] : memref<98xf32, #tpu.memory_space<smem>>
    %276 = vector.broadcast %275 : f32 to vector<2x256xf32>
    %277 = arith.mulf %12, %276 : vector<2x256xf32>
    %278 = arith.addf %274, %277 : vector<2x256xf32>
    %c46 = arith.constant 46 : index
    %279 = memref.load %arg7[%c46] : memref<98xf32, #tpu.memory_space<smem>>
    %280 = vector.broadcast %279 : f32 to vector<2x256xf32>
    %281 = arith.mulf %74, %280 : vector<2x256xf32>
    %282 = arith.addf %278, %281 : vector<2x256xf32>
    %c47 = arith.constant 47 : index
    %283 = memref.load %arg7[%c47] : memref<98xf32, #tpu.memory_space<smem>>
    %284 = vector.broadcast %283 : f32 to vector<2x256xf32>
    %285 = arith.mulf %77, %284 : vector<2x256xf32>
    %286 = arith.addf %282, %285 : vector<2x256xf32>
    %c48 = arith.constant 48 : index
    %287 = memref.load %arg7[%c48] : memref<98xf32, #tpu.memory_space<smem>>
    %288 = vector.broadcast %287 : f32 to vector<2x256xf32>
    %289 = arith.mulf %80, %288 : vector<2x256xf32>
    %290 = arith.addf %286, %289 : vector<2x256xf32>
    %c208_i32_47 = arith.constant 208 : i32
    %291 = tpu.dynamic_rotate %290 by %c208_i32_47 dim 1 : vector<2x256xf32>, i32 -> vector<2x256xf32>
    %cst_48 = arith.constant 0.000000e+00 : f32
    %292 = vector.broadcast %cst_48 : f32 to vector<2x256xf32>
    %293 = arith.select %60, %291, %292 : vector<2x256xi1>, vector<2x256xf32>
    %294 = arith.addf %263, %293 : vector<2x256xf32>
    %c3_i32_49 = arith.constant 3 : i32
    %295 = tpu.dynamic_rotate %15 by %c3_i32_49 dim 1 : vector<2x256xf32>, i32 -> vector<2x256xf32>
    %cst_50 = arith.constant 0.000000e+00 : f32
    %296 = vector.broadcast %cst_50 : f32 to vector<2x256xf32>
    %297 = arith.select %38, %295, %296 : vector<2x256xi1>, vector<2x256xf32>
    %c2_i32_51 = arith.constant 2 : i32
    %298 = tpu.dynamic_rotate %15 by %c2_i32_51 dim 1 : vector<2x256xf32>, i32 -> vector<2x256xf32>
    %cst_52 = arith.constant 0.000000e+00 : f32
    %299 = vector.broadcast %cst_52 : f32 to vector<2x256xf32>
    %300 = arith.select %40, %298, %299 : vector<2x256xi1>, vector<2x256xf32>
    %c1_i32_53 = arith.constant 1 : i32
    %301 = tpu.dynamic_rotate %15 by %c1_i32_53 dim 1 : vector<2x256xf32>, i32 -> vector<2x256xf32>
    %cst_54 = arith.constant 0.000000e+00 : f32
    %302 = vector.broadcast %cst_54 : f32 to vector<2x256xf32>
    %303 = arith.select %42, %301, %302 : vector<2x256xi1>, vector<2x256xf32>
    %c255_i32_55 = arith.constant 255 : i32
    %304 = tpu.dynamic_rotate %15 by %c255_i32_55 dim 1 : vector<2x256xf32>, i32 -> vector<2x256xf32>
    %cst_56 = arith.constant 0.000000e+00 : f32
    %305 = vector.broadcast %cst_56 : f32 to vector<2x256xf32>
    %306 = arith.select %44, %304, %305 : vector<2x256xi1>, vector<2x256xf32>
    %c254_i32_57 = arith.constant 254 : i32
    %307 = tpu.dynamic_rotate %15 by %c254_i32_57 dim 1 : vector<2x256xf32>, i32 -> vector<2x256xf32>
    %cst_58 = arith.constant 0.000000e+00 : f32
    %308 = vector.broadcast %cst_58 : f32 to vector<2x256xf32>
    %309 = arith.select %46, %307, %308 : vector<2x256xi1>, vector<2x256xf32>
    %c253_i32_59 = arith.constant 253 : i32
    %310 = tpu.dynamic_rotate %15 by %c253_i32_59 dim 1 : vector<2x256xf32>, i32 -> vector<2x256xf32>
    %cst_60 = arith.constant 0.000000e+00 : f32
    %311 = vector.broadcast %cst_60 : f32 to vector<2x256xf32>
    %312 = arith.select %48, %310, %311 : vector<2x256xi1>, vector<2x256xf32>
    %c49 = arith.constant 49 : index
    %313 = memref.load %arg7[%c49] : memref<98xf32, #tpu.memory_space<smem>>
    %314 = vector.broadcast %313 : f32 to vector<2x256xf32>
    %315 = arith.mulf %297, %314 : vector<2x256xf32>
    %c50 = arith.constant 50 : index
    %316 = memref.load %arg7[%c50] : memref<98xf32, #tpu.memory_space<smem>>
    %317 = vector.broadcast %316 : f32 to vector<2x256xf32>
    %318 = arith.mulf %300, %317 : vector<2x256xf32>
    %319 = arith.addf %315, %318 : vector<2x256xf32>
    %c51 = arith.constant 51 : index
    %320 = memref.load %arg7[%c51] : memref<98xf32, #tpu.memory_space<smem>>
    %321 = vector.broadcast %320 : f32 to vector<2x256xf32>
    %322 = arith.mulf %303, %321 : vector<2x256xf32>
    %323 = arith.addf %319, %322 : vector<2x256xf32>
    %c52 = arith.constant 52 : index
    %324 = memref.load %arg7[%c52] : memref<98xf32, #tpu.memory_space<smem>>
    %325 = vector.broadcast %324 : f32 to vector<2x256xf32>
    %326 = arith.mulf %15, %325 : vector<2x256xf32>
    %327 = arith.addf %323, %326 : vector<2x256xf32>
    %c53 = arith.constant 53 : index
    %328 = memref.load %arg7[%c53] : memref<98xf32, #tpu.memory_space<smem>>
    %329 = vector.broadcast %328 : f32 to vector<2x256xf32>
    %330 = arith.mulf %306, %329 : vector<2x256xf32>
    %331 = arith.addf %327, %330 : vector<2x256xf32>
    %c54 = arith.constant 54 : index
    %332 = memref.load %arg7[%c54] : memref<98xf32, #tpu.memory_space<smem>>
    %333 = vector.broadcast %332 : f32 to vector<2x256xf32>
    %334 = arith.mulf %309, %333 : vector<2x256xf32>
    %335 = arith.addf %331, %334 : vector<2x256xf32>
    %c55 = arith.constant 55 : index
    %336 = memref.load %arg7[%c55] : memref<98xf32, #tpu.memory_space<smem>>
    %337 = vector.broadcast %336 : f32 to vector<2x256xf32>
    %338 = arith.mulf %312, %337 : vector<2x256xf32>
    %339 = arith.addf %335, %338 : vector<2x256xf32>
    %c48_i32_61 = arith.constant 48 : i32
    %340 = tpu.dynamic_rotate %339 by %c48_i32_61 dim 1 : vector<2x256xf32>, i32 -> vector<2x256xf32>
    %cst_62 = arith.constant 0.000000e+00 : f32
    %341 = vector.broadcast %cst_62 : f32 to vector<2x256xf32>
    %342 = arith.select %50, %340, %341 : vector<2x256xi1>, vector<2x256xf32>
    %343 = arith.addf %294, %342 : vector<2x256xf32>
    %c56 = arith.constant 56 : index
    %344 = memref.load %arg7[%c56] : memref<98xf32, #tpu.memory_space<smem>>
    %345 = vector.broadcast %344 : f32 to vector<2x256xf32>
    %346 = arith.mulf %297, %345 : vector<2x256xf32>
    %c57 = arith.constant 57 : index
    %347 = memref.load %arg7[%c57] : memref<98xf32, #tpu.memory_space<smem>>
    %348 = vector.broadcast %347 : f32 to vector<2x256xf32>
    %349 = arith.mulf %300, %348 : vector<2x256xf32>
    %350 = arith.addf %346, %349 : vector<2x256xf32>
    %c58 = arith.constant 58 : index
    %351 = memref.load %arg7[%c58] : memref<98xf32, #tpu.memory_space<smem>>
    %352 = vector.broadcast %351 : f32 to vector<2x256xf32>
    %353 = arith.mulf %303, %352 : vector<2x256xf32>
    %354 = arith.addf %350, %353 : vector<2x256xf32>
    %c59 = arith.constant 59 : index
    %355 = memref.load %arg7[%c59] : memref<98xf32, #tpu.memory_space<smem>>
    %356 = vector.broadcast %355 : f32 to vector<2x256xf32>
    %357 = arith.mulf %15, %356 : vector<2x256xf32>
    %358 = arith.addf %354, %357 : vector<2x256xf32>
    %c60 = arith.constant 60 : index
    %359 = memref.load %arg7[%c60] : memref<98xf32, #tpu.memory_space<smem>>
    %360 = vector.broadcast %359 : f32 to vector<2x256xf32>
    %361 = arith.mulf %306, %360 : vector<2x256xf32>
    %362 = arith.addf %358, %361 : vector<2x256xf32>
    %c61 = arith.constant 61 : index
    %363 = memref.load %arg7[%c61] : memref<98xf32, #tpu.memory_space<smem>>
    %364 = vector.broadcast %363 : f32 to vector<2x256xf32>
    %365 = arith.mulf %309, %364 : vector<2x256xf32>
    %366 = arith.addf %362, %365 : vector<2x256xf32>
    %c62 = arith.constant 62 : index
    %367 = memref.load %arg7[%c62] : memref<98xf32, #tpu.memory_space<smem>>
    %368 = vector.broadcast %367 : f32 to vector<2x256xf32>
    %369 = arith.mulf %312, %368 : vector<2x256xf32>
    %370 = arith.addf %366, %369 : vector<2x256xf32>
    %c32_i32_63 = arith.constant 32 : i32
    %371 = tpu.dynamic_rotate %370 by %c32_i32_63 dim 1 : vector<2x256xf32>, i32 -> vector<2x256xf32>
    %cst_64 = arith.constant 0.000000e+00 : f32
    %372 = vector.broadcast %cst_64 : f32 to vector<2x256xf32>
    %373 = arith.select %52, %371, %372 : vector<2x256xi1>, vector<2x256xf32>
    %374 = arith.addf %343, %373 : vector<2x256xf32>
    %c63 = arith.constant 63 : index
    %375 = memref.load %arg7[%c63] : memref<98xf32, #tpu.memory_space<smem>>
    %376 = vector.broadcast %375 : f32 to vector<2x256xf32>
    %377 = arith.mulf %297, %376 : vector<2x256xf32>
    %c64 = arith.constant 64 : index
    %378 = memref.load %arg7[%c64] : memref<98xf32, #tpu.memory_space<smem>>
    %379 = vector.broadcast %378 : f32 to vector<2x256xf32>
    %380 = arith.mulf %300, %379 : vector<2x256xf32>
    %381 = arith.addf %377, %380 : vector<2x256xf32>
    %c65 = arith.constant 65 : index
    %382 = memref.load %arg7[%c65] : memref<98xf32, #tpu.memory_space<smem>>
    %383 = vector.broadcast %382 : f32 to vector<2x256xf32>
    %384 = arith.mulf %303, %383 : vector<2x256xf32>
    %385 = arith.addf %381, %384 : vector<2x256xf32>
    %c66 = arith.constant 66 : index
    %386 = memref.load %arg7[%c66] : memref<98xf32, #tpu.memory_space<smem>>
    %387 = vector.broadcast %386 : f32 to vector<2x256xf32>
    %388 = arith.mulf %15, %387 : vector<2x256xf32>
    %389 = arith.addf %385, %388 : vector<2x256xf32>
    %c67 = arith.constant 67 : index
    %390 = memref.load %arg7[%c67] : memref<98xf32, #tpu.memory_space<smem>>
    %391 = vector.broadcast %390 : f32 to vector<2x256xf32>
    %392 = arith.mulf %306, %391 : vector<2x256xf32>
    %393 = arith.addf %389, %392 : vector<2x256xf32>
    %c68 = arith.constant 68 : index
    %394 = memref.load %arg7[%c68] : memref<98xf32, #tpu.memory_space<smem>>
    %395 = vector.broadcast %394 : f32 to vector<2x256xf32>
    %396 = arith.mulf %309, %395 : vector<2x256xf32>
    %397 = arith.addf %393, %396 : vector<2x256xf32>
    %c69 = arith.constant 69 : index
    %398 = memref.load %arg7[%c69] : memref<98xf32, #tpu.memory_space<smem>>
    %399 = vector.broadcast %398 : f32 to vector<2x256xf32>
    %400 = arith.mulf %312, %399 : vector<2x256xf32>
    %401 = arith.addf %397, %400 : vector<2x256xf32>
    %c16_i32_65 = arith.constant 16 : i32
    %402 = tpu.dynamic_rotate %401 by %c16_i32_65 dim 1 : vector<2x256xf32>, i32 -> vector<2x256xf32>
    %cst_66 = arith.constant 0.000000e+00 : f32
    %403 = vector.broadcast %cst_66 : f32 to vector<2x256xf32>
    %404 = arith.select %54, %402, %403 : vector<2x256xi1>, vector<2x256xf32>
    %405 = arith.addf %374, %404 : vector<2x256xf32>
    %c70 = arith.constant 70 : index
    %406 = memref.load %arg7[%c70] : memref<98xf32, #tpu.memory_space<smem>>
    %407 = vector.broadcast %406 : f32 to vector<2x256xf32>
    %408 = arith.mulf %297, %407 : vector<2x256xf32>
    %c71 = arith.constant 71 : index
    %409 = memref.load %arg7[%c71] : memref<98xf32, #tpu.memory_space<smem>>
    %410 = vector.broadcast %409 : f32 to vector<2x256xf32>
    %411 = arith.mulf %300, %410 : vector<2x256xf32>
    %412 = arith.addf %408, %411 : vector<2x256xf32>
    %c72 = arith.constant 72 : index
    %413 = memref.load %arg7[%c72] : memref<98xf32, #tpu.memory_space<smem>>
    %414 = vector.broadcast %413 : f32 to vector<2x256xf32>
    %415 = arith.mulf %303, %414 : vector<2x256xf32>
    %416 = arith.addf %412, %415 : vector<2x256xf32>
    %c73 = arith.constant 73 : index
    %417 = memref.load %arg7[%c73] : memref<98xf32, #tpu.memory_space<smem>>
    %418 = vector.broadcast %417 : f32 to vector<2x256xf32>
    %419 = arith.mulf %15, %418 : vector<2x256xf32>
    %420 = arith.addf %416, %419 : vector<2x256xf32>
    %c74 = arith.constant 74 : index
    %421 = memref.load %arg7[%c74] : memref<98xf32, #tpu.memory_space<smem>>
    %422 = vector.broadcast %421 : f32 to vector<2x256xf32>
    %423 = arith.mulf %306, %422 : vector<2x256xf32>
    %424 = arith.addf %420, %423 : vector<2x256xf32>
    %c75 = arith.constant 75 : index
    %425 = memref.load %arg7[%c75] : memref<98xf32, #tpu.memory_space<smem>>
    %426 = vector.broadcast %425 : f32 to vector<2x256xf32>
    %427 = arith.mulf %309, %426 : vector<2x256xf32>
    %428 = arith.addf %424, %427 : vector<2x256xf32>
    %c76 = arith.constant 76 : index
    %429 = memref.load %arg7[%c76] : memref<98xf32, #tpu.memory_space<smem>>
    %430 = vector.broadcast %429 : f32 to vector<2x256xf32>
    %431 = arith.mulf %312, %430 : vector<2x256xf32>
    %432 = arith.addf %428, %431 : vector<2x256xf32>
    %433 = arith.addf %405, %432 : vector<2x256xf32>
    %c77 = arith.constant 77 : index
    %434 = memref.load %arg7[%c77] : memref<98xf32, #tpu.memory_space<smem>>
    %435 = vector.broadcast %434 : f32 to vector<2x256xf32>
    %436 = arith.mulf %297, %435 : vector<2x256xf32>
    %c78 = arith.constant 78 : index
    %437 = memref.load %arg7[%c78] : memref<98xf32, #tpu.memory_space<smem>>
    %438 = vector.broadcast %437 : f32 to vector<2x256xf32>
    %439 = arith.mulf %300, %438 : vector<2x256xf32>
    %440 = arith.addf %436, %439 : vector<2x256xf32>
    %c79 = arith.constant 79 : index
    %441 = memref.load %arg7[%c79] : memref<98xf32, #tpu.memory_space<smem>>
    %442 = vector.broadcast %441 : f32 to vector<2x256xf32>
    %443 = arith.mulf %303, %442 : vector<2x256xf32>
    %444 = arith.addf %440, %443 : vector<2x256xf32>
    %c80 = arith.constant 80 : index
    %445 = memref.load %arg7[%c80] : memref<98xf32, #tpu.memory_space<smem>>
    %446 = vector.broadcast %445 : f32 to vector<2x256xf32>
    %447 = arith.mulf %15, %446 : vector<2x256xf32>
    %448 = arith.addf %444, %447 : vector<2x256xf32>
    %c81 = arith.constant 81 : index
    %449 = memref.load %arg7[%c81] : memref<98xf32, #tpu.memory_space<smem>>
    %450 = vector.broadcast %449 : f32 to vector<2x256xf32>
    %451 = arith.mulf %306, %450 : vector<2x256xf32>
    %452 = arith.addf %448, %451 : vector<2x256xf32>
    %c82 = arith.constant 82 : index
    %453 = memref.load %arg7[%c82] : memref<98xf32, #tpu.memory_space<smem>>
    %454 = vector.broadcast %453 : f32 to vector<2x256xf32>
    %455 = arith.mulf %309, %454 : vector<2x256xf32>
    %456 = arith.addf %452, %455 : vector<2x256xf32>
    %c83 = arith.constant 83 : index
    %457 = memref.load %arg7[%c83] : memref<98xf32, #tpu.memory_space<smem>>
    %458 = vector.broadcast %457 : f32 to vector<2x256xf32>
    %459 = arith.mulf %312, %458 : vector<2x256xf32>
    %460 = arith.addf %456, %459 : vector<2x256xf32>
    %c240_i32_67 = arith.constant 240 : i32
    %461 = tpu.dynamic_rotate %460 by %c240_i32_67 dim 1 : vector<2x256xf32>, i32 -> vector<2x256xf32>
    %cst_68 = arith.constant 0.000000e+00 : f32
    %462 = vector.broadcast %cst_68 : f32 to vector<2x256xf32>
    %463 = arith.select %56, %461, %462 : vector<2x256xi1>, vector<2x256xf32>
    %464 = arith.addf %433, %463 : vector<2x256xf32>
    %c84 = arith.constant 84 : index
    %465 = memref.load %arg7[%c84] : memref<98xf32, #tpu.memory_space<smem>>
    %466 = vector.broadcast %465 : f32 to vector<2x256xf32>
    %467 = arith.mulf %297, %466 : vector<2x256xf32>
    %c85 = arith.constant 85 : index
    %468 = memref.load %arg7[%c85] : memref<98xf32, #tpu.memory_space<smem>>
    %469 = vector.broadcast %468 : f32 to vector<2x256xf32>
    %470 = arith.mulf %300, %469 : vector<2x256xf32>
    %471 = arith.addf %467, %470 : vector<2x256xf32>
    %c86 = arith.constant 86 : index
    %472 = memref.load %arg7[%c86] : memref<98xf32, #tpu.memory_space<smem>>
    %473 = vector.broadcast %472 : f32 to vector<2x256xf32>
    %474 = arith.mulf %303, %473 : vector<2x256xf32>
    %475 = arith.addf %471, %474 : vector<2x256xf32>
    %c87 = arith.constant 87 : index
    %476 = memref.load %arg7[%c87] : memref<98xf32, #tpu.memory_space<smem>>
    %477 = vector.broadcast %476 : f32 to vector<2x256xf32>
    %478 = arith.mulf %15, %477 : vector<2x256xf32>
    %479 = arith.addf %475, %478 : vector<2x256xf32>
    %c88 = arith.constant 88 : index
    %480 = memref.load %arg7[%c88] : memref<98xf32, #tpu.memory_space<smem>>
    %481 = vector.broadcast %480 : f32 to vector<2x256xf32>
    %482 = arith.mulf %306, %481 : vector<2x256xf32>
    %483 = arith.addf %479, %482 : vector<2x256xf32>
    %c89 = arith.constant 89 : index
    %484 = memref.load %arg7[%c89] : memref<98xf32, #tpu.memory_space<smem>>
    %485 = vector.broadcast %484 : f32 to vector<2x256xf32>
    %486 = arith.mulf %309, %485 : vector<2x256xf32>
    %487 = arith.addf %483, %486 : vector<2x256xf32>
    %c90 = arith.constant 90 : index
    %488 = memref.load %arg7[%c90] : memref<98xf32, #tpu.memory_space<smem>>
    %489 = vector.broadcast %488 : f32 to vector<2x256xf32>
    %490 = arith.mulf %312, %489 : vector<2x256xf32>
    %491 = arith.addf %487, %490 : vector<2x256xf32>
    %c224_i32_69 = arith.constant 224 : i32
    %492 = tpu.dynamic_rotate %491 by %c224_i32_69 dim 1 : vector<2x256xf32>, i32 -> vector<2x256xf32>
    %cst_70 = arith.constant 0.000000e+00 : f32
    %493 = vector.broadcast %cst_70 : f32 to vector<2x256xf32>
    %494 = arith.select %58, %492, %493 : vector<2x256xi1>, vector<2x256xf32>
    %495 = arith.addf %464, %494 : vector<2x256xf32>
    %c91 = arith.constant 91 : index
    %496 = memref.load %arg7[%c91] : memref<98xf32, #tpu.memory_space<smem>>
    %497 = vector.broadcast %496 : f32 to vector<2x256xf32>
    %498 = arith.mulf %297, %497 : vector<2x256xf32>
    %c92 = arith.constant 92 : index
    %499 = memref.load %arg7[%c92] : memref<98xf32, #tpu.memory_space<smem>>
    %500 = vector.broadcast %499 : f32 to vector<2x256xf32>
    %501 = arith.mulf %300, %500 : vector<2x256xf32>
    %502 = arith.addf %498, %501 : vector<2x256xf32>
    %c93 = arith.constant 93 : index
    %503 = memref.load %arg7[%c93] : memref<98xf32, #tpu.memory_space<smem>>
    %504 = vector.broadcast %503 : f32 to vector<2x256xf32>
    %505 = arith.mulf %303, %504 : vector<2x256xf32>
    %506 = arith.addf %502, %505 : vector<2x256xf32>
    %c94 = arith.constant 94 : index
    %507 = memref.load %arg7[%c94] : memref<98xf32, #tpu.memory_space<smem>>
    %508 = vector.broadcast %507 : f32 to vector<2x256xf32>
    %509 = arith.mulf %15, %508 : vector<2x256xf32>
    %510 = arith.addf %506, %509 : vector<2x256xf32>
    %c95 = arith.constant 95 : index
    %511 = memref.load %arg7[%c95] : memref<98xf32, #tpu.memory_space<smem>>
    %512 = vector.broadcast %511 : f32 to vector<2x256xf32>
    %513 = arith.mulf %306, %512 : vector<2x256xf32>
    %514 = arith.addf %510, %513 : vector<2x256xf32>
    %c96 = arith.constant 96 : index
    %515 = memref.load %arg7[%c96] : memref<98xf32, #tpu.memory_space<smem>>
    %516 = vector.broadcast %515 : f32 to vector<2x256xf32>
    %517 = arith.mulf %309, %516 : vector<2x256xf32>
    %518 = arith.addf %514, %517 : vector<2x256xf32>
    %c97 = arith.constant 97 : index
    %519 = memref.load %arg7[%c97] : memref<98xf32, #tpu.memory_space<smem>>
    %520 = vector.broadcast %519 : f32 to vector<2x256xf32>
    %521 = arith.mulf %312, %520 : vector<2x256xf32>
    %522 = arith.addf %518, %521 : vector<2x256xf32>
    %c208_i32_71 = arith.constant 208 : i32
    %523 = tpu.dynamic_rotate %522 by %c208_i32_71 dim 1 : vector<2x256xf32>, i32 -> vector<2x256xf32>
    %cst_72 = arith.constant 0.000000e+00 : f32
    %524 = vector.broadcast %cst_72 : f32 to vector<2x256xf32>
    %525 = arith.select %60, %523, %524 : vector<2x256xi1>, vector<2x256xf32>
    %526 = arith.addf %495, %525 : vector<2x256xf32>
    %527 = arith.negf %526 : vector<2x256xf32>
    %528 = math.exp %527 : vector<2x256xf32>
    %cst_73 = arith.constant 1.000000e+00 : f32
    %529 = vector.broadcast %cst_73 : f32 to vector<2x256xf32>
    %530 = arith.addf %529, %528 : vector<2x256xf32>
    %531 = arith.divf %529, %530 : vector<2x256xf32>
    %c0_74 = arith.constant 0 : index
    %532 = memref.load %arg9[%c0_74] : memref<1xf32, #tpu.memory_space<smem>>
    %533 = vector.broadcast %532 : f32 to vector<2x16xf32>
    %534 = arith.mulf %533, %33 : vector<2x16xf32>
    %535 = vector.shape_cast %534 : vector<2x16xf32> to vector<2x16x1xf32>
    %c0_75 = arith.constant 0 : index
    %c0_76 = arith.constant 0 : index
    %c0_77 = arith.constant 0 : index
    %536 = vector.load %arg1[%c0_75, %c0_76, %c0_77] : memref<2x16x256xf32, #tpu.memory_space<vmem>>, vector<2x16x256xf32>
    %537 = vector.shape_cast %531 : vector<2x256xf32> to vector<2x1x256xf32>
    %538 = vector.broadcast %535 : vector<2x16x1xf32> to vector<2x16x256xf32>
    %539 = vector.broadcast %537 : vector<2x1x256xf32> to vector<2x16x256xf32>
    %540 = arith.mulf %538, %539 : vector<2x16x256xf32>
    %c0_78 = arith.constant 0 : index
    %c0_79 = arith.constant 0 : index
    %c0_80 = arith.constant 0 : index
    %541 = vector.load %arg2[%c0_78, %c0_79, %c0_80] : memref<2x16x256xf32, #tpu.memory_space<vmem>>, vector<2x16x256xf32>
    %542 = arith.mulf %540, %541 : vector<2x16x256xf32>
    %543 = arith.addf %536, %542 : vector<2x16x256xf32>
    %c0_81 = arith.constant 0 : index
    %c0_82 = arith.constant 0 : index
    %c0_83 = arith.constant 0 : index
    %544 = vector.load %arg10[%c0_81, %c0_82, %c0_83] : memref<2x16x256xf32, #tpu.memory_space<vmem>>, vector<2x16x256xf32>
    tpu.vector_store %arg10[%c0_81, %c0_82, %c0_83], %543 {strides = array<i32>} : memref<2x16x256xf32, #tpu.memory_space<vmem>>, vector<2x16x256xf32>,
    return
  }
  func.func @transform_0(%arg0: i32) -> (i32, i32, i32) {
    %c0_i32 = arith.constant 0 : i32
    %c0_i32_0 = arith.constant 0 : i32
    %c0_i32_1 = arith.constant 0 : i32
    return %arg0, %c0_i32, %c0_i32_0 : i32, i32, i32
  }
  func.func @transform_1(%arg0: i32) -> (i32, i32, i32) {
    %c0_i32 = arith.constant 0 : i32
    %c0_i32_0 = arith.constant 0 : i32
    %c0_i32_1 = arith.constant 0 : i32
    return %arg0, %c0_i32, %c0_i32_0 : i32, i32, i32
  }
  func.func @transform_2(%arg0: i32) -> (i32, i32) {
    %c0_i32 = arith.constant 0 : i32
    %c0_i32_0 = arith.constant 0 : i32
    %c0_i32_1 = arith.constant 0 : i32
    return %c0_i32, %c0_i32_0 : i32, i32
  }
  func.func @transform_3(%arg0: i32) -> (i32, i32) {
    %c0_i32 = arith.constant 0 : i32
    %c0_i32_0 = arith.constant 0 : i32
    %c0_i32_1 = arith.constant 0 : i32
    return %c0_i32, %c0_i32_0 : i32, i32
  }
  func.func @transform_4(%arg0: i32) -> (i32, i32) {
    %c0_i32 = arith.constant 0 : i32
    %c0_i32_0 = arith.constant 0 : i32
    %c0_i32_1 = arith.constant 0 : i32
    return %c0_i32, %c0_i32_0 : i32, i32
  }
  func.func @transform_5(%arg0: i32) -> (i32, i32) {
    %c0_i32 = arith.constant 0 : i32
    %c0_i32_0 = arith.constant 0 : i32
    %c0_i32_1 = arith.constant 0 : i32
    return %c0_i32, %c0_i32_0 : i32, i32
  }
  func.func @transform_6(%arg0: i32) -> i32 {
    %c0_i32 = arith.constant 0 : i32
    %c0_i32_0 = arith.constant 0 : i32
    return %c0_i32 : i32
  }
  func.func @transform_7(%arg0: i32) -> i32 {
    %c0_i32 = arith.constant 0 : i32
    %c0_i32_0 = arith.constant 0 : i32
    return %c0_i32 : i32
  }
  func.func @transform_8(%arg0: i32) -> i32 {
    %c0_i32 = arith.constant 0 : i32
    %c0_i32_0 = arith.constant 0 : i32
    return %c0_i32 : i32
  }
  func.func @transform_9(%arg0: i32) -> (i32, i32, i32) {
    %c0_i32 = arith.constant 0 : i32
    %c0_i32_0 = arith.constant 0 : i32
    %c0_i32_1 = arith.constant 0 : i32
    return %arg0, %c0_i32, %c0_i32_0 : i32, i32, i32
  }
}

</mosaic_0001>

<llo_original>
// kernel: tpu_custom_call.1
$region0: #{tpu_custom_call.1}
  #allocation0 [shape = 'u32[]', space=smem, size = 0x4, offset = 0x4, fixed_abs, tag = 'smem constant byte address 0x4 - core index']
  #allocation1 [shape = 'u32[144,128]{1,0:T(1,128)}', space=vmem, size = 0x12000, scoped, tag = 'internal scratch']
  #allocation2 [shape = 'f32[1]{0:T(128)S(6)}', space=smem, size = 0x200, scoped, tag = 'scoped memory for tpu_custom_call.1']
  #allocation3 [shape = 'f32[1]{0:T(128)S(6)}', space=smem, size = 0x200, scoped, tag = 'scoped memory for tpu_custom_call.1']
  %s0 = inlined_call_operand.hbm [shape: f32[2,16,256], index: 0, kind: input, shape index: {}]
  %s1 = inlined_call_operand.hbm [shape: f32[2,16,256], index: 1, kind: input, shape index: {}]
  %s2 = inlined_call_operand.vmem [shape: f32[32,2], index: 2, kind: input, shape index: {}]
  %s3 = inlined_call_operand.vmem [shape: f32[1,2], index: 3, kind: input, shape index: {}]
  %s4 = inlined_call_operand.vmem [shape: f32[2,16], index: 4, kind: input, shape index: {}]
  %s5 = inlined_call_operand.vmem [shape: f32[1,16], index: 5, kind: input, shape index: {}]
  %s6 = inlined_call_operand.vmem [shape: f32[98], index: 6, kind: input, shape index: {}]
  %s7 = inlined_call_operand.<no memory space> [shape: f32[1], index: 7, kind: input, shape index: {}]
  %s8 = inlined_call_operand.<no memory space> [shape: f32[1], index: 8, kind: input, shape index: {}]
  %s9 = inlined_call_operand.hbm [shape: f32[2,16,256], index: 9, kind: output, shape index: {}]
  %s10 = sld [smem:[#allocation0]]
  $region58: #{tpu_custom_call.1} parent=0
    _
  %s12 = ssub.s32 1, %s10
  %s13 = scalar_select 0, %s12, %s10
  %14 = sst [smem:[#allocation2]] %s7
  %15 = sst [smem:[#allocation3]] %s8
  $region1: #{tpu_custom_call.1} parent=0
    #allocation4 [shape = 'u8[32768]{0}', space=vmem, size = 0x8000, scoped, tag = 'input window, operand 0, single buffered']
    #allocation5 [shape = 's32[1]{0}', space=sflag, size = 0x4, scoped, tag = 'scoped memory for tpu_custom_call.1']
    #allocation6 [shape = 's32[1]{0}', space=sflag, size = 0x4, scoped, tag = 'scoped memory for tpu_custom_call.1']
    #allocation7 [shape = 's32[1]{0}', space=sflag, size = 0x4, scoped, tag = 'scoped memory for tpu_custom_call.1']
    #allocation8 [shape = 'u8[32768]{0}', space=vmem, size = 0x8000, scoped, tag = 'input window, operand 1, single buffered']
    #allocation9 [shape = 's32[1]{0}', space=sflag, size = 0x4, scoped, tag = 'scoped memory for tpu_custom_call.1']
    #allocation10 [shape = 'u8[512]{0}', space=smem, size = 0x200, scoped, tag = 'input window, operand 6, single buffered']
    #allocation11 [shape = 'u8[32768]{0}', space=vmem, size = 0x8000, scoped, tag = 'output window, operand 0, single buffered']
    %16 = vsyncpa [#allocation5], 0
    %17 = vsyncpa [#allocation9], 0
    %18 = vsyncpa [#allocation7], 0
    %19 = vsyncpa [#allocation6], 0
    // Predicated region
    $region2: #{tpu_custom_call.1} parent=1 // pred_check
      _
    $region3: #{tpu_custom_call.1} parent=1 // pred_check_branch
      %21 = sbr.rel (0) target = $region5
    $region4: #{tpu_custom_call.1} parent=1 // pred_region
      %s23 = ssub.s32 1024, 1024
      %24 = vsyncadd [#allocation5], %s23
      %s25 = sshll.u32 [#allocation4], 4
      %s26 = int_to_ptr.vmem [resolvable:$true] %s25
      %31 = dma.hbm_to_vmem [thread:$0]  %s0, 1024, %s26, [#allocation5], 256, 256, 16
    $region5: #{tpu_custom_call.1} parent=1 // pred_fallthru
      _
    // Predicated region
    $region6: #{tpu_custom_call.1} parent=1 // pred_check
      _
    $region7: #{tpu_custom_call.1} parent=1 // pred_check_branch
      %33 = sbr.rel (0) target = $region9
    $region8: #{tpu_custom_call.1} parent=1 // pred_region
      %s35 = ssub.s32 1024, 1024
      %36 = vsyncadd [#allocation9], %s35
      %s37 = sshll.u32 [#allocation8], 4
      %s38 = int_to_ptr.vmem [resolvable:$true] %s37
      %43 = dma.hbm_to_vmem [thread:$0]  %s1, 1024, %s38, [#allocation9], 256, 256, 16
    $region9: #{tpu_custom_call.1} parent=1 // pred_fallthru
      _
    // Predicated region
    $region10: #{tpu_custom_call.1} parent=1 // pred_check
      _
    $region11: #{tpu_custom_call.1} parent=1 // pred_check_branch
      %45 = sbr.rel (0) target = $region13
    $region12: #{tpu_custom_call.1} parent=1 // pred_region
      _
    $region13: #{tpu_custom_call.1} parent=1 // pred_fallthru
      _
    // Predicated region
    $region14: #{tpu_custom_call.1} parent=1 // pred_check
      _
    $region15: #{tpu_custom_call.1} parent=1 // pred_check_branch
      %47 = sbr.rel (0) target = $region17
    $region16: #{tpu_custom_call.1} parent=1 // pred_region
      _
    $region17: #{tpu_custom_call.1} parent=1 // pred_fallthru
      _
    // Predicated region
    $region18: #{tpu_custom_call.1} parent=1 // pred_check
      _
    $region19: #{tpu_custom_call.1} parent=1 // pred_check_branch
      %49 = sbr.rel (0) target = $region21
    $region20: #{tpu_custom_call.1} parent=1 // pred_region
      _
    $region21: #{tpu_custom_call.1} parent=1 // pred_fallthru
      _
    // Predicated region
    $region22: #{tpu_custom_call.1} parent=1 // pred_check
      _
    $region23: #{tpu_custom_call.1} parent=1 // pred_check_branch
      %51 = sbr.rel (0) target = $region25
    $region24: #{tpu_custom_call.1} parent=1 // pred_region
      _
    $region25: #{tpu_custom_call.1} parent=1 // pred_fallthru
      _
    // Predicated region
    $region26: #{tpu_custom_call.1} parent=1 // pred_check
      _
    $region27: #{tpu_custom_call.1} parent=1 // pred_check_branch
      %53 = sbr.rel (0) target = $region29
    $region28: #{tpu_custom_call.1} parent=1 // pred_region
      %s55 = ssub.s32 16, 16
      %56 = vsyncadd [#allocation7], %s55
      %s58 = sshll.u32 %s6, 4
      %s59 = int_to_ptr.vmem [resolvable:$true] %s58
      %61 = dma.vmem_to_smem %s59, 16, [#allocation10], [#allocation7]
    $region29: #{tpu_custom_call.1} parent=1 // pred_fallthru
      _
    // Predicated region
    $region30: #{tpu_custom_call.1} parent=1 // pred_check
      _
    $region31: #{tpu_custom_call.1} parent=1 // pred_check_branch
      %63 = sbr.rel (0) target = $region33
    $region32: #{tpu_custom_call.1} parent=1 // pred_region
      _
    $region33: #{tpu_custom_call.1} parent=1 // pred_fallthru
      _
    // Predicated region
    $region34: #{tpu_custom_call.1} parent=1 // pred_check
      _
    $region35: #{tpu_custom_call.1} parent=1 // pred_check_branch
      %65 = sbr.rel (0) target = $region37
    $region36: #{tpu_custom_call.1} parent=1 // pred_region
      _
    $region37: #{tpu_custom_call.1} parent=1 // pred_fallthru
      _
    // Predicated region
    $region38: #{tpu_custom_call.1} parent=1 // pred_check
      _
    $region39: #{tpu_custom_call.1} parent=1 // pred_check_branch
      %67 = sbr.rel (0) target = $region41
    $region40: #{tpu_custom_call.1} parent=1 // pred_region
      %68 = dma.done [#allocation5], 1024
    $region41: #{tpu_custom_call.1} parent=1 // pred_fallthru
      _
    // Predicated region
    $region42: #{tpu_custom_call.1} parent=1 // pred_check
      _
    $region43: #{tpu_custom_call.1} parent=1 // pred_check_branch
      %70 = sbr.rel (0) target = $region45
    $region44: #{tpu_custom_call.1} parent=1 // pred_region
      %71 = dma.done [#allocation9], 1024
    $region45: #{tpu_custom_call.1} parent=1 // pred_fallthru
      _
    // Predicated region
    $region46: #{tpu_custom_call.1} parent=1 // pred_check
      _
    $region47: #{tpu_custom_call.1} parent=1 // pred_check_branch
      %73 = sbr.rel (0) target = $region49
    $region48: #{tpu_custom_call.1} parent=1 // pred_region
      %74 = dma.done [#allocation7], 16
    $region49: #{tpu_custom_call.1} parent=1 // pred_fallthru
      _
    %75 = sfence
    %v76 = vld [vmem:[#allocation4] sm:$0xff]
    %v77 = vld [vmem:[#allocation4 + $0x8] sm:$0xff]
    %v78 = vld [vmem:[#allocation4 + $0x10] sm:$0xff]
    %v79 = vld [vmem:[#allocation4 + $0x18] sm:$0xff]
    %v80 = vld [vmem:[#allocation4 + $0x20] sm:$0xff]
    %v81 = vld [vmem:[#allocation4 + $0x28] sm:$0xff]
    %v82 = vld [vmem:[#allocation4 + $0x30] sm:$0xff]
    %v83 = vld [vmem:[#allocation4 + $0x38] sm:$0xff]
    %v84 = vadd.f32 %v76, %v77
    %85 = vadd.xlane.f32.xlu0 %v84
    %v86 = vpop.xlane.xlu0 %85
    %v87 = vadd.f32 %v78, %v79
    %88 = vadd.xlane.f32.xlu0 %v87
    %v89 = vpop.xlane.xlu0 %88
    %v90 = vadd.f32 %v80, %v81
    %91 = vadd.xlane.f32.xlu0 %v90
    %v92 = vpop.xlane.xlu0 %91
    %v93 = vadd.f32 %v82, %v83
    %94 = vadd.xlane.f32.xlu0 %v93
    %v95 = vpop.xlane.xlu0 %94
    %v96 = vrcp.pop 256.0
    %v97 = vmul.f32 %v86, %v96
    %v98 = vmul.f32 %v89, %v96
    %v99 = vmul.f32 %v92, %v96
    %v100 = vmul.f32 %v95, %v96
    %v101 = vmax.f32 %v76, %v78
    %v102 = vrot.slane %v101, 4
    %v103 = vmax.f32 %v101, %v102
    %v104 = vrot.slane %v103, 2
    %v105 = vmax.f32 %v103, %v104
    %v106 = vrot.slane %v105, 1
    %v107 = vmax.f32 %v105, %v106
    %v108 = vmax.f32 %v77, %v79
    %v109 = vrot.slane %v108, 4
    %v110 = vmax.f32 %v108, %v109
    %v111 = vrot.slane %v110, 2
    %v112 = vmax.f32 %v110, %v111
    %v113 = vrot.slane %v112, 1
    %v114 = vmax.f32 %v112, %v113
    %v115 = vmax.f32 %v80, %v82
    %v116 = vrot.slane %v115, 4
    %v117 = vmax.f32 %v115, %v116
    %v118 = vrot.slane %v117, 2
    %v119 = vmax.f32 %v117, %v118
    %v120 = vrot.slane %v119, 1
    %v121 = vmax.f32 %v119, %v120
    %v122 = vmax.f32 %v81, %v83
    %v123 = vrot.slane %v122, 4
    %v124 = vmax.f32 %v122, %v123
    %v125 = vrot.slane %v124, 2
    %v126 = vmax.f32 %v124, %v125
    %v127 = vrot.slane %v126, 1
    %v128 = vmax.f32 %v126, %v127
    %v129 = vadd.f32 %v76, %v78
    %v130 = vrot.slane %v129, 4
    %v131 = vadd.f32 %v129, %v130
    %v132 = vrot.slane %v131, 2
    %v133 = vadd.f32 %v131, %v132
    %v134 = vrot.slane %v133, 1
    %v135 = vadd.f32 %v133, %v134
    %v136 = vadd.f32 %v77, %v79
    %v137 = vrot.slane %v136, 4
    %v138 = vadd.f32 %v136, %v137
    %v139 = vrot.slane %v138, 2
    %v140 = vadd.f32 %v138, %v139
    %v141 = vrot.slane %v140, 1
    %v142 = vadd.f32 %v140, %v141
    %v143 = vadd.f32 %v80, %v82
    %v144 = vrot.slane %v143, 4
    %v145 = vadd.f32 %v143, %v144
    %v146 = vrot.slane %v145, 2
    %v147 = vadd.f32 %v145, %v146
    %v148 = vrot.slane %v147, 1
    %v149 = vadd.f32 %v147, %v148
    %v150 = vadd.f32 %v81, %v83
    %v151 = vrot.slane %v150, 4
    %v152 = vadd.f32 %v150, %v151
    %v153 = vrot.slane %v152, 2
    %v154 = vadd.f32 %v152, %v153
    %v155 = vrot.slane %v154, 1
    %v156 = vadd.f32 %v154, %v155
    %v157 = vld [vmem:[#allocation8] sm:$0xff]
    %v158 = vld [vmem:[#allocation8 + $0x8] sm:$0xff]
    %v159 = vld [vmem:[#allocation8 + $0x10] sm:$0xff]
    %v160 = vld [vmem:[#allocation8 + $0x18] sm:$0xff]
    %v161 = vld [vmem:[#allocation8 + $0x20] sm:$0xff]
    %v162 = vld [vmem:[#allocation8 + $0x28] sm:$0xff]
    %v163 = vld [vmem:[#allocation8 + $0x30] sm:$0xff]
    %v164 = vld [vmem:[#allocation8 + $0x38] sm:$0xff]
    %v165 = vadd.f32 %v157, %v158
    %166 = vadd.xlane.f32.xlu0 %v165
    %v167 = vpop.xlane.xlu0 %166
    %v168 = vadd.f32 %v159, %v160
    %169 = vadd.xlane.f32.xlu0 %v168
    %v170 = vpop.xlane.xlu0 %169
    %v171 = vadd.f32 %v161, %v162
    %172 = vadd.xlane.f32.xlu0 %v171
    %v173 = vpop.xlane.xlu0 %172
    %v174 = vadd.f32 %v163, %v164
    %175 = vadd.xlane.f32.xlu0 %v174
    %v176 = vpop.xlane.xlu0 %175
    %v177 = vmul.f32 %v167, %v96
    %v178 = vmul.f32 %v170, %v96
    %v179 = vmul.f32 %v173, %v96
    %v180 = vmul.f32 %v176, %v96
    %v181 = vmax.f32 %v157, %v159
    %v182 = vrot.slane %v181, 4
    %v183 = vmax.f32 %v181, %v182
    %v184 = vrot.slane %v183, 2
    %v185 = vmax.f32 %v183, %v184
    %v186 = vrot.slane %v185, 1
    %v187 = vmax.f32 %v185, %v186
    %v188 = vmax.f32 %v158, %v160
    %v189 = vrot.slane %v188, 4
    %v190 = vmax.f32 %v188, %v189
    %v191 = vrot.slane %v190, 2
    %v192 = vmax.f32 %v190, %v191
    %v193 = vrot.slane %v192, 1
    %v194 = vmax.f32 %v192, %v193
    %v195 = vmax.f32 %v161, %v163
    %v196 = vrot.slane %v195, 4
    %v197 = vmax.f32 %v195, %v196
    %v198 = vrot.slane %v197, 2
    %v199 = vmax.f32 %v197, %v198
    %v200 = vrot.slane %v199, 1
    %v201 = vmax.f32 %v199, %v200
    %v202 = vmax.f32 %v162, %v164
    %v203 = vrot.slane %v202, 4
    %v204 = vmax.f32 %v202, %v203
    %v205 = vrot.slane %v204, 2
    %v206 = vmax.f32 %v204, %v205
    %v207 = vrot.slane %v206, 1
    %v208 = vmax.f32 %v206, %v207
    %v209 = vadd.f32 %v157, %v159
    %v210 = vrot.slane %v209, 4
    %v211 = vadd.f32 %v209, %v210
    %v212 = vrot.slane %v211, 2
    %v213 = vadd.f32 %v211, %v212
    %v214 = vrot.slane %v213, 1
    %v215 = vadd.f32 %v213, %v214
    %v216 = vadd.f32 %v158, %v160
    %v217 = vrot.slane %v216, 4
    %v218 = vadd.f32 %v216, %v217
    %v219 = vrot.slane %v218, 2
    %v220 = vadd.f32 %v218, %v219
    %v221 = vrot.slane %v220, 1
    %v222 = vadd.f32 %v220, %v221
    %v223 = vadd.f32 %v161, %v163
    %v224 = vrot.slane %v223, 4
    %v225 = vadd.f32 %v223, %v224
    %v226 = vrot.slane %v225, 2
    %v227 = vadd.f32 %v225, %v226
    %v228 = vrot.slane %v227, 1
    %v229 = vadd.f32 %v227, %v228
    %v230 = vadd.f32 %v162, %v164
    %v231 = vrot.slane %v230, 4
    %v232 = vadd.f32 %v230, %v231
    %v233 = vrot.slane %v232, 2
    %v234 = vadd.f32 %v232, %v233
    %v235 = vrot.slane %v234, 1
    %v236 = vadd.f32 %v234, %v235
    %v237 = vmax.f32 %v107, %v187
    %v238 = vmax.f32 %v114, %v194
    %v239 = vmax.f32 %v121, %v201
    %v240 = vmax.f32 %v128, %v208
    %v241 = vadd.f32 %v135, %v215
    %v242 = vadd.f32 %v142, %v222
    %v243 = vadd.f32 %v149, %v229
    %v244 = vadd.f32 %v156, %v236
    %v245 = vmul.f32 %v241, 0.03125
    %v246 = vmul.f32 %v242, 0.03125
    %v247 = vmul.f32 %v243, 0.03125
    %v248 = vmul.f32 %v244, 0.03125
    %v253 = vlaneseq
    %v254 = vand.u32 %v253, 127
    %v255 = vlaneseq
    %v256 = vshrl.u32 %v255, 7
    %v257 = vsub.s32 %v254, %v256
    %v258 = vrot.slane %v97, %v257
    %v259 = vadd.s32 %v254, 4294967288
    %v260 = vlaneseq
    %v261 = vshrl.u32 %v260, 7
    %v262 = vsub.s32 %v259, %v261
    %v263 = vrot.slane %v98, %v262
    %vm264 = vcmask 130112
    %v265 = vsel %vm264, %v263, %v258
    %v266 = vlaneseq
    %v267 = vshrl.u32 %v266, 7
    %v268 = vsub.s32 %v254, %v267
    %v269 = vrot.slane %v99, %v268
    %v270 = vlaneseq
    %v271 = vshrl.u32 %v270, 7
    %v272 = vsub.s32 %v259, %v271
    %v273 = vrot.slane %v100, %v272
    %v274 = vsel %vm264, %v273, %v269
    %vm275 = vcmask 1041409
    %v276 = vsel %vm275, %v274, %v265
    %v282 = vadd.s32 %v254, 4294967280
    %v283 = vlaneseq
    %v284 = vshrl.u32 %v283, 7
    %v285 = vsub.s32 %v282, %v284
    %v286 = vrot.slane %v177, %v285
    %v287 = vadd.s32 %v254, 4294967272
    %v288 = vlaneseq
    %v289 = vshrl.u32 %v288, 7
    %v290 = vsub.s32 %v287, %v289
    %v291 = vrot.slane %v178, %v290
    %vm292 = vcmask 261312
    %v293 = vsel %vm292, %v291, %v286
    %v294 = vlaneseq
    %v295 = vshrl.u32 %v294, 7
    %v296 = vsub.s32 %v282, %v295
    %v297 = vrot.slane %v179, %v296
    %v298 = vlaneseq
    %v299 = vshrl.u32 %v298, 7
    %v300 = vsub.s32 %v287, %v299
    %v301 = vrot.slane %v180, %v300
    %v302 = vsel %vm292, %v301, %v297
    %v303 = vsel %vm275, %v302, %v293
    %vm305 = vcmask 130048
    %v306 = vsel %vm305, %v276, %v303
    %v307 = vld [vmem:[%s2] sm:$0xff]
    %v308 = vld [vmem:[%s2 + $0x8] sm:$0xff]
    %v309 = vld [vmem:[%s2 + $0x10] sm:$0xff]
    %v310 = vld [vmem:[%s2 + $0x18] sm:$0xff]
    %v311 = vld [vmem:[%s3] sm:$0x1]
    %v313 = vlaneseq
    %v314 = vshrl.u32 %v313, 7
    %v315 = vsub.s32 0, %v314
    %v316 = vrot.slane %v311, %v315
    %vm318 = vcmask 261120
    %v320 = vsel %vm318, %v306, 0
    %322 = vmatprep.subr.mxu0 0.0
    %323 = vmatpush1.msra.mxu0 0.0
    %324 = vmatprep.subr.mxu0 0.0
    %325 = vmatpush1.msra.mxu0 0.0
    %326 = vmatprep.subr.mxu0 0.0
    %327 = vmatpush1.msra.mxu0 0.0
    %328 = vmatprep.subr.mxu0 0.0
    %329 = vmatpush1.msra.mxu0 0.0
    %330 = vmatprep.subr.mxu0 0.0
    %331 = vmatpush1.msra.mxu0 0.0
    %332 = vmatprep.subr.mxu0 0.0
    %333 = vmatpush1.msra.mxu0 0.0
    %334 = vmatprep.subr.mxu0 0.0
    %335 = vmatpush1.msra.mxu0 0.0
    %336 = vmatprep.subr.mxu0 0.0
    %337 = vmatpush1.msra.mxu0 0.0
    %338 = vmatprep.subr.mxu0 0.0
    %339 = vmatpush1.msra.mxu0 0.0
    %340 = vmatprep.subr.mxu0 0.0
    %341 = vmatpush1.msra.mxu0 0.0
    %342 = vmatprep.subr.mxu0 0.0
    %343 = vmatpush1.msra.mxu0 0.0
    %344 = vmatprep.subr.mxu0 0.0
    %345 = vmatpush1.msra.mxu0 0.0
    %346 = vmatprep.subr.mxu0 0.0
    %347 = vmatpush1.msra.mxu0 %v310
    %348 = vmatprep.subr.mxu0 0.0
    %349 = vmatpush1.msra.mxu0 %v309
    %350 = vmatprep.subr.mxu0 0.0
    %351 = vmatpush1.msra.mxu0 %v308
    %352 = vmatprep.subr.mxu0 0.0
    %353 = vmatpush1.msra.mxu0 %v307
    %354 = vmatprep.subr.mxu0 0.0
    %355 = vmatpush2.msra.mxu0 0.0
    %356 = vmatprep.subr.mxu0 0.0
    %357 = vmatpush2.msra.mxu0 0.0
    %358 = vmatprep.subr.mxu0 0.0
    %359 = vmatpush2.msra.mxu0 0.0
    %360 = vmatprep.subr.mxu0 0.0
    %361 = vmatpush2.msra.mxu0 0.0
    %362 = vmatprep.subr.mxu0 0.0
    %363 = vmatpush2.msra.mxu0 0.0
    %364 = vmatprep.subr.mxu0 0.0
    %365 = vmatpush2.msra.mxu0 0.0
    %366 = vmatprep.subr.mxu0 0.0
    %367 = vmatpush2.msra.mxu0 0.0
    %368 = vmatprep.subr.mxu0 0.0
    %369 = vmatpush2.msra.mxu0 0.0
    %370 = vmatprep.subr.mxu0 0.0
    %371 = vmatpush2.msra.mxu0 0.0
    %372 = vmatprep.subr.mxu0 0.0
    %373 = vmatpush2.msra.mxu0 0.0
    %374 = vmatprep.subr.mxu0 0.0
    %375 = vmatpush2.msra.mxu0 0.0
    %376 = vmatprep.subr.mxu0 0.0
    %377 = vmatpush2.msra.mxu0 0.0
    %378 = vmatprep.subr.mxu0 0.0
    %379 = vmatpush2.msra.mxu0 0.0
    %380 = vmatprep.subr.mxu0 0.0
    %381 = vmatpush2.msra.mxu0 0.0
    %382 = vmatprep.subr.mxu0 0.0
    %383 = vmatpush2.msra.mxu0 0.0
    %384 = vmatprep.subr.mxu0 0.0
    %385 = vmatpush2.msra.mxu0 0.0
    %386 = vmatprep.mubr.f32.mxu0 0.0
    %387 = vmatmul.mubr.f32.gmra.mxu0 %v320
    %v388 = vpop.f32.mrf.mxu0
    %v389 = vadd.f32 %v316, %v388
    %v390 = vpop.f32.mrf.mxu0
    %391 = vdwg.mxu0
    %v392 = vmax.f32 %v389, 0.0
    %v393 = vld [vmem:[%s4] sm:$0x3]
    %v394 = vld [vmem:[%s5] sm:$0x1]
    %v396 = vlaneseq
    %v397 = vshrl.u32 %v396, 7
    %v398 = vsub.s32 0, %v397
    %v399 = vrot.slane %v394, %v398
    %vm401 = vcmask 15360
    %v403 = vsel %vm401, %v392, 0
    %vm405 = vcmask 1041408
    %v407 = vsel %vm405, %v393, 0
    %409 = vmatprep.subr.mxu0 0.0
    %410 = vmatpush1.msra.mxu0 0.0
    %411 = vmatprep.subr.mxu0 0.0
    %412 = vmatpush1.msra.mxu0 0.0
    %413 = vmatprep.subr.mxu0 0.0
    %414 = vmatpush1.msra.mxu0 0.0
    %415 = vmatprep.subr.mxu0 0.0
    %416 = vmatpush1.msra.mxu0 0.0
    %417 = vmatprep.subr.mxu0 0.0
    %418 = vmatpush1.msra.mxu0 0.0
    %419 = vmatprep.subr.mxu0 0.0
    %420 = vmatpush1.msra.mxu0 0.0
    %421 = vmatprep.subr.mxu0 0.0
    %422 = vmatpush1.msra.mxu0 0.0
    %423 = vmatprep.subr.mxu0 0.0
    %424 = vmatpush1.msra.mxu0 0.0
    %425 = vmatprep.subr.mxu0 0.0
    %426 = vmatpush1.msra.mxu0 0.0
    %427 = vmatprep.subr.mxu0 0.0
    %428 = vmatpush1.msra.mxu0 0.0
    %429 = vmatprep.subr.mxu0 0.0
    %430 = vmatpush1.msra.mxu0 0.0
    %431 = vmatprep.subr.mxu0 0.0
    %432 = vmatpush1.msra.mxu0 0.0
    %433 = vmatprep.subr.mxu0 0.0
    %434 = vmatpush1.msra.mxu0 0.0
    %435 = vmatprep.subr.mxu0 0.0
    %436 = vmatpush1.msra.mxu0 0.0
    %437 = vmatprep.subr.mxu0 0.0
    %438 = vmatpush1.msra.mxu0 0.0
    %439 = vmatprep.subr.mxu0 0.0
    %440 = vmatpush1.msra.mxu0 %v407
    %441 = vmatprep.subr.mxu0 0.0
    %442 = vmatpush2.msra.mxu0 0.0
    %443 = vmatprep.subr.mxu0 0.0
    %444 = vmatpush2.msra.mxu0 0.0
    %445 = vmatprep.subr.mxu0 0.0
    %446 = vmatpush2.msra.mxu0 0.0
    %447 = vmatprep.subr.mxu0 0.0
    %448 = vmatpush2.msra.mxu0 0.0
    %449 = vmatprep.subr.mxu0 0.0
    %450 = vmatpush2.msra.mxu0 0.0
    %451 = vmatprep.subr.mxu0 0.0
    %452 = vmatpush2.msra.mxu0 0.0
    %453 = vmatprep.subr.mxu0 0.0
    %454 = vmatpush2.msra.mxu0 0.0
    %455 = vmatprep.subr.mxu0 0.0
    %456 = vmatpush2.msra.mxu0 0.0
    %457 = vmatprep.subr.mxu0 0.0
    %458 = vmatpush2.msra.mxu0 0.0
    %459 = vmatprep.subr.mxu0 0.0
    %460 = vmatpush2.msra.mxu0 0.0
    %461 = vmatprep.subr.mxu0 0.0
    %462 = vmatpush2.msra.mxu0 0.0
    %463 = vmatprep.subr.mxu0 0.0
    %464 = vmatpush2.msra.mxu0 0.0
    %465 = vmatprep.subr.mxu0 0.0
    %466 = vmatpush2.msra.mxu0 0.0
    %467 = vmatprep.subr.mxu0 0.0
    %468 = vmatpush2.msra.mxu0 0.0
    %469 = vmatprep.subr.mxu0 0.0
    %470 = vmatpush2.msra.mxu0 0.0
    %471 = vmatprep.subr.mxu0 0.0
    %472 = vmatpush2.msra.mxu0 0.0
    %473 = vmatprep.mubr.f32.mxu0 0.0
    %474 = vmatmul.mubr.f32.gmra.mxu0 %v403
    %v475 = vpop.f32.mrf.mxu0
    %v476 = vadd.f32 %v399, %v475
    %v477 = vpop.f32.mrf.mxu0
    %478 = vdwg.mxu0
    %v479 = vxor.u32 %v476, 2147483648
    %v480 = vmul.f32 %v479, 1.442695
    %v481 = vpow.pop %v480
    %v482 = vadd.f32 %v481, 1.0
    %v483 = vrcp.pop %v482
    %v484 = vmul.f32 1.0, %v483
    %v485 = vadd.s32 %v254, 128
    %v486 = vand.u32 %v254, 15
    %v487 = vand.u32 %v485, 15
    %vm488 = vcmp.ge.s32.totalorder %v486, 3
    %vm489 = vcmp.ge.s32.totalorder %v487, 3
    %vm490 = vcmp.ge.s32.totalorder %v486, 2
    %vm491 = vcmp.ge.s32.totalorder %v487, 2
    %vm492 = vcmp.ge.s32.totalorder %v486, 1
    %vm493 = vcmp.ge.s32.totalorder %v487, 1
    %vm494 = vcmp.lt.s32.totalorder %v486, 15
    %vm495 = vcmp.lt.s32.totalorder %v487, 15
    %vm496 = vcmp.lt.s32.totalorder %v486, 14
    %vm497 = vcmp.lt.s32.totalorder %v487, 14
    %vm498 = vcmp.lt.s32.totalorder %v486, 13
    %vm499 = vcmp.lt.s32.totalorder %v487, 13
    %vm500 = vcmp.ge.s32.totalorder %v254, 48
    %vm501 = vcmp.ge.s32.totalorder %v485, 48
    %vm502 = vcmp.ge.s32.totalorder %v254, 32
    %vm503 = vcmp.ge.s32.totalorder %v485, 32
    %vm504 = vcmp.ge.s32.totalorder %v254, 16
    %vm505 = vcmp.ge.s32.totalorder %v485, 16
    %vm506 = vcmp.lt.s32.totalorder %v254, 240
    %vm507 = vcmp.lt.s32.totalorder %v485, 240
    %vm508 = vcmp.lt.s32.totalorder %v254, 224
    %vm509 = vcmp.lt.s32.totalorder %v485, 224
    %vm510 = vcmp.lt.s32.totalorder %v254, 208
    %vm511 = vcmp.lt.s32.totalorder %v485, 208
    %s512 = sld [smem:[#allocation2]]
    %v513 = vstv %s512
    %v518 = vsel %vm275, %v239, %v237
    %v519 = vsel %vm275, %v240, %v238
    %522 = vrot.lane.b32.xlu0 %v518, 3
    %v523 = vpop.permute.xlu0 %522
    %524 = vrot.lane.b32.xlu0 %v519, 3
    %v525 = vpop.permute.xlu0 %524
    %vm526 = vcmp.lt.s32.totalorder %v254, 3
    %v527 = vsel %vm526, %v523, %v525
    %v528 = vsel %vm526, %v525, %v523
    %v529 = vsel %vm488, %v528, 0.0
    %v530 = vsel %vm489, %v527, 0.0
    %531 = vrot.lane.b32.xlu0 %v518, 2
    %v532 = vpop.permute.xlu0 %531
    %533 = vrot.lane.b32.xlu0 %v519, 2
    %v534 = vpop.permute.xlu0 %533
    %vm535 = vcmp.lt.s32.totalorder %v254, 2
    %v536 = vsel %vm535, %v532, %v534
    %v537 = vsel %vm535, %v534, %v532
    %v538 = vsel %vm490, %v537, 0.0
    %v539 = vsel %vm491, %v536, 0.0
    %540 = vrot.lane.b32.xlu0 %v518, 1
    %v541 = vpop.permute.xlu0 %540
    %542 = vrot.lane.b32.xlu0 %v519, 1
    %v543 = vpop.permute.xlu0 %542
    %vm544 = vcmp.lt.s32.totalorder %v254, 1
    %v545 = vsel %vm544, %v541, %v543
    %v546 = vsel %vm544, %v543, %v541
    %v547 = vsel %vm492, %v546, 0.0
    %v548 = vsel %vm493, %v545, 0.0
    %549 = vrot.lane.b32.xlu0 %v518, 127
    %v550 = vpop.permute.xlu0 %549
    %551 = vrot.lane.b32.xlu0 %v519, 127
    %v552 = vpop.permute.xlu0 %551
    %vm553 = vcmp.lt.s32.totalorder %v254, 127
    %v554 = vsel %vm553, %v550, %v552
    %v555 = vsel %vm553, %v552, %v550
    %v556 = vsel %vm494, %v554, 0.0
    %v557 = vsel %vm495, %v555, 0.0
    %558 = vrot.lane.b32.xlu0 %v518, 126
    %v559 = vpop.permute.xlu0 %558
    %560 = vrot.lane.b32.xlu0 %v519, 126
    %v561 = vpop.permute.xlu0 %560
    %vm562 = vcmp.lt.s32.totalorder %v254, 126
    %v563 = vsel %vm562, %v559, %v561
    %v564 = vsel %vm562, %v561, %v559
    %v565 = vsel %vm496, %v563, 0.0
    %v566 = vsel %vm497, %v564, 0.0
    %567 = vrot.lane.b32.xlu0 %v518, 125
    %v568 = vpop.permute.xlu0 %567
    %569 = vrot.lane.b32.xlu0 %v519, 125
    %v570 = vpop.permute.xlu0 %569
    %vm571 = vcmp.lt.s32.totalorder %v254, 125
    %v572 = vsel %vm571, %v568, %v570
    %v573 = vsel %vm571, %v570, %v568
    %v574 = vsel %vm498, %v572, 0.0
    %v575 = vsel %vm499, %v573, 0.0
    %s576 = sld [smem:[#allocation10]]
    %v577 = vstv %s576
    %v578 = vmul.f32 %v529, %v577
    %v579 = vmul.f32 %v530, %v577
    %s580 = sld [smem:[#allocation10 + $0x1]]
    %v581 = vstv %s580
    %v582 = vmul.f32 %v538, %v581
    %v583 = vmul.f32 %v539, %v581
    %v584 = vadd.f32 %v578, %v582
    %v585 = vadd.f32 %v579, %v583
    %s586 = sld [smem:[#allocation10 + $0x2]]
    %v587 = vstv %s586
    %v588 = vmul.f32 %v547, %v587
    %v589 = vmul.f32 %v548, %v587
    %v590 = vadd.f32 %v584, %v588
    %v591 = vadd.f32 %v585, %v589
    %s592 = sld [smem:[#allocation10 + $0x3]]
    %v593 = vstv %s592
    %v594 = vmul.f32 %v237, %v593
    %v595 = vmul.f32 %v238, %v593
    %v596 = vmul.f32 %v239, %v593
    %v597 = vmul.f32 %v240, %v593
    %v602 = vsel %vm275, %v596, %v594
    %v603 = vsel %vm275, %v597, %v595
    %v606 = vadd.f32 %v590, %v602
    %v607 = vadd.f32 %v591, %v603
    %s608 = sld [smem:[#allocation10 + $0x4]]
    %v609 = vstv %s608
    %v610 = vmul.f32 %v556, %v609
    %v611 = vmul.f32 %v557, %v609
    %v612 = vadd.f32 %v606, %v610
    %v613 = vadd.f32 %v607, %v611
    %s614 = sld [smem:[#allocation10 + $0x5]]
    %v615 = vstv %s614
    %v616 = vmul.f32 %v565, %v615
    %v617 = vmul.f32 %v566, %v615
    %v618 = vadd.f32 %v612, %v616
    %v619 = vadd.f32 %v613, %v617
    %s620 = sld [smem:[#allocation10 + $0x6]]
    %v621 = vstv %s620
    %v622 = vmul.f32 %v574, %v621
    %v623 = vmul.f32 %v575, %v621
    %v624 = vadd.f32 %v618, %v622
    %v625 = vadd.f32 %v619, %v623
    %626 = vrot.lane.b32.xlu0 %v624, 48
    %v627 = vpop.permute.xlu0 %626
    %628 = vrot.lane.b32.xlu0 %v625, 48
    %v629 = vpop.permute.xlu0 %628
    %vm630 = vcmp.lt.s32.totalorder %v254, 48
    %v631 = vsel %vm630, %v627, %v629
    %v632 = vsel %vm630, %v629, %v627
    %v633 = vsel %vm500, %v632, 0.0
    %v634 = vsel %vm501, %v631, 0.0
    %v635 = vadd.f32 %v513, %v633
    %v636 = vadd.f32 %v513, %v634
    %s637 = sld [smem:[#allocation10 + $0x7]]
    %v638 = vstv %s637
    %v639 = vmul.f32 %v529, %v638
    %v640 = vmul.f32 %v530, %v638
    %s641 = sld [smem:[#allocation10 + $0x8]]
    %v642 = vstv %s641
    %v643 = vmul.f32 %v538, %v642
    %v644 = vmul.f32 %v539, %v642
    %v645 = vadd.f32 %v639, %v643
    %v646 = vadd.f32 %v640, %v644
    %s647 = sld [smem:[#allocation10 + $0x9]]
    %v648 = vstv %s647
    %v649 = vmul.f32 %v547, %v648
    %v650 = vmul.f32 %v548, %v648
    %v651 = vadd.f32 %v645, %v649
    %v652 = vadd.f32 %v646, %v650
    %s653 = sld [smem:[#allocation10 + $0xa]]
    %v654 = vstv %s653
    %v655 = vmul.f32 %v237, %v654
    %v656 = vmul.f32 %v238, %v654
    %v657 = vmul.f32 %v239, %v654
    %v658 = vmul.f32 %v240, %v654
    %v663 = vsel %vm275, %v657, %v655
    %v664 = vsel %vm275, %v658, %v656
    %v667 = vadd.f32 %v651, %v663
    %v668 = vadd.f32 %v652, %v664
    %s669 = sld [smem:[#allocation10 + $0xb]]
    %v670 = vstv %s669
    %v671 = vmul.f32 %v556, %v670
    %v672 = vmul.f32 %v557, %v670
    %v673 = vadd.f32 %v667, %v671
    %v674 = vadd.f32 %v668, %v672
    %s675 = sld [smem:[#allocation10 + $0xc]]
    %v676 = vstv %s675
    %v677 = vmul.f32 %v565, %v676
    %v678 = vmul.f32 %v566, %v676
    %v679 = vadd.f32 %v673, %v677
    %v680 = vadd.f32 %v674, %v678
    %s681 = sld [smem:[#allocation10 + $0xd]]
    %v682 = vstv %s681
    %v683 = vmul.f32 %v574, %v682
    %v684 = vmul.f32 %v575, %v682
    %v685 = vadd.f32 %v679, %v683
    %v686 = vadd.f32 %v680, %v684
    %687 = vrot.lane.b32.xlu0 %v685, 32
    %v688 = vpop.permute.xlu0 %687
    %689 = vrot.lane.b32.xlu0 %v686, 32
    %v690 = vpop.permute.xlu0 %689
    %vm691 = vcmp.lt.s32.totalorder %v254, 32
    %v692 = vsel %vm691, %v688, %v690
    %v693 = vsel %vm691, %v690, %v688
    %v694 = vsel %vm502, %v693, 0.0
    %v695 = vsel %vm503, %v692, 0.0
    %v696 = vadd.f32 %v635, %v694
    %v697 = vadd.f32 %v636, %v695
    %s698 = sld [smem:[#allocation10 + $0xe]]
    %v699 = vstv %s698
    %v700 = vmul.f32 %v529, %v699
    %v701 = vmul.f32 %v530, %v699
    %s702 = sld [smem:[#allocation10 + $0xf]]
    %v703 = vstv %s702
    %v704 = vmul.f32 %v538, %v703
    %v705 = vmul.f32 %v539, %v703
    %v706 = vadd.f32 %v700, %v704
    %v707 = vadd.f32 %v701, %v705
    %s708 = sld [smem:[#allocation10 + $0x10]]
    %v709 = vstv %s708
    %v710 = vmul.f32 %v547, %v709
    %v711 = vmul.f32 %v548, %v709
    %v712 = vadd.f32 %v706, %v710
    %v713 = vadd.f32 %v707, %v711
    %s714 = sld [smem:[#allocation10 + $0x11]]
    %v715 = vstv %s714
    %v716 = vmul.f32 %v237, %v715
    %v717 = vmul.f32 %v238, %v715
    %v718 = vmul.f32 %v239, %v715
    %v719 = vmul.f32 %v240, %v715
    %v724 = vsel %vm275, %v718, %v716
    %v725 = vsel %vm275, %v719, %v717
    %v728 = vadd.f32 %v712, %v724
    %v729 = vadd.f32 %v713, %v725
    %s730 = sld [smem:[#allocation10 + $0x12]]
    %v731 = vstv %s730
    %v732 = vmul.f32 %v556, %v731
    %v733 = vmul.f32 %v557, %v731
    %v734 = vadd.f32 %v728, %v732
    %v735 = vadd.f32 %v729, %v733
    %s736 = sld [smem:[#allocation10 + $0x13]]
    %v737 = vstv %s736
    %v738 = vmul.f32 %v565, %v737
    %v739 = vmul.f32 %v566, %v737
    %v740 = vadd.f32 %v734, %v738
    %v741 = vadd.f32 %v735, %v739
    %s742 = sld [smem:[#allocation10 + $0x14]]
    %v743 = vstv %s742
    %v744 = vmul.f32 %v574, %v743
    %v745 = vmul.f32 %v575, %v743
    %v746 = vadd.f32 %v740, %v744
    %v747 = vadd.f32 %v741, %v745
    %748 = vrot.lane.b32.xlu0 %v746, 16
    %v749 = vpop.permute.xlu0 %748
    %750 = vrot.lane.b32.xlu0 %v747, 16
    %v751 = vpop.permute.xlu0 %750
    %vm752 = vcmp.lt.s32.totalorder %v254, 16
    %v753 = vsel %vm752, %v749, %v751
    %v754 = vsel %vm752, %v751, %v749
    %v755 = vsel %vm504, %v754, 0.0
    %v756 = vsel %vm505, %v753, 0.0
    %v757 = vadd.f32 %v696, %v755
    %v758 = vadd.f32 %v697, %v756
    %s759 = sld [smem:[#allocation10 + $0x15]]
    %v760 = vstv %s759
    %v761 = vmul.f32 %v529, %v760
    %v762 = vmul.f32 %v530, %v760
    %s763 = sld [smem:[#allocation10 + $0x16]]
    %v764 = vstv %s763
    %v765 = vmul.f32 %v538, %v764
    %v766 = vmul.f32 %v539, %v764
    %v767 = vadd.f32 %v761, %v765
    %v768 = vadd.f32 %v762, %v766
    %s769 = sld [smem:[#allocation10 + $0x17]]
    %v770 = vstv %s769
    %v771 = vmul.f32 %v547, %v770
    %v772 = vmul.f32 %v548, %v770
    %v773 = vadd.f32 %v767, %v771
    %v774 = vadd.f32 %v768, %v772
    %s775 = sld [smem:[#allocation10 + $0x18]]
    %v776 = vstv %s775
    %v777 = vmul.f32 %v237, %v776
    %v778 = vmul.f32 %v238, %v776
    %v779 = vmul.f32 %v239, %v776
    %v780 = vmul.f32 %v240, %v776
    %v785 = vsel %vm275, %v779, %v777
    %v786 = vsel %vm275, %v780, %v778
    %v789 = vadd.f32 %v773, %v785
    %v790 = vadd.f32 %v774, %v786
    %s791 = sld [smem:[#allocation10 + $0x19]]
    %v792 = vstv %s791
    %v793 = vmul.f32 %v556, %v792
    %v794 = vmul.f32 %v557, %v792
    %v795 = vadd.f32 %v789, %v793
    %v796 = vadd.f32 %v790, %v794
    %s797 = sld [smem:[#allocation10 + $0x1a]]
    %v798 = vstv %s797
    %v799 = vmul.f32 %v565, %v798
    %v800 = vmul.f32 %v566, %v798
    %v801 = vadd.f32 %v795, %v799
    %v802 = vadd.f32 %v796, %v800
    %s803 = sld [smem:[#allocation10 + $0x1b]]
    %v804 = vstv %s803
    %v805 = vmul.f32 %v574, %v804
    %v806 = vmul.f32 %v575, %v804
    %v807 = vadd.f32 %v801, %v805
    %v808 = vadd.f32 %v802, %v806
    %v809 = vadd.f32 %v757, %v807
    %v810 = vadd.f32 %v758, %v808
    %s811 = sld [smem:[#allocation10 + $0x1c]]
    %v812 = vstv %s811
    %v813 = vmul.f32 %v529, %v812
    %v814 = vmul.f32 %v530, %v812
    %s815 = sld [smem:[#allocation10 + $0x1d]]
    %v816 = vstv %s815
    %v817 = vmul.f32 %v538, %v816
    %v818 = vmul.f32 %v539, %v816
    %v819 = vadd.f32 %v813, %v817
    %v820 = vadd.f32 %v814, %v818
    %s821 = sld [smem:[#allocation10 + $0x1e]]
    %v822 = vstv %s821
    %v823 = vmul.f32 %v547, %v822
    %v824 = vmul.f32 %v548, %v822
    %v825 = vadd.f32 %v819, %v823
    %v826 = vadd.f32 %v820, %v824
    %s827 = sld [smem:[#allocation10 + $0x1f]]
    %v828 = vstv %s827
    %v829 = vmul.f32 %v237, %v828
    %v830 = vmul.f32 %v238, %v828
    %v831 = vmul.f32 %v239, %v828
    %v832 = vmul.f32 %v240, %v828
    %v837 = vsel %vm275, %v831, %v829
    %v838 = vsel %vm275, %v832, %v830
    %v841 = vadd.f32 %v825, %v837
    %v842 = vadd.f32 %v826, %v838
    %s843 = sld [smem:[#allocation10 + $0x20]]
    %v844 = vstv %s843
    %v845 = vmul.f32 %v556, %v844
    %v846 = vmul.f32 %v557, %v844
    %v847 = vadd.f32 %v841, %v845
    %v848 = vadd.f32 %v842, %v846
    %s849 = sld [smem:[#allocation10 + $0x21]]
    %v850 = vstv %s849
    %v851 = vmul.f32 %v565, %v850
    %v852 = vmul.f32 %v566, %v850
    %v853 = vadd.f32 %v847, %v851
    %v854 = vadd.f32 %v848, %v852
    %s855 = sld [smem:[#allocation10 + $0x22]]
    %v856 = vstv %s855
    %v857 = vmul.f32 %v574, %v856
    %v858 = vmul.f32 %v575, %v856
    %v859 = vadd.f32 %v853, %v857
    %v860 = vadd.f32 %v854, %v858
    %861 = vrot.lane.b32.xlu0 %v859, 112
    %v862 = vpop.permute.xlu0 %861
    %863 = vrot.lane.b32.xlu0 %v860, 112
    %v864 = vpop.permute.xlu0 %863
    %vm865 = vcmp.lt.s32.totalorder %v254, 112
    %v866 = vsel %vm865, %v862, %v864
    %v867 = vsel %vm865, %v864, %v862
    %v868 = vsel %vm506, %v866, 0.0
    %v869 = vsel %vm507, %v867, 0.0
    %v870 = vadd.f32 %v809, %v868
    %v871 = vadd.f32 %v810, %v869
    %s872 = sld [smem:[#allocation10 + $0x23]]
    %v873 = vstv %s872
    %v874 = vmul.f32 %v529, %v873
    %v875 = vmul.f32 %v530, %v873
    %s876 = sld [smem:[#allocation10 + $0x24]]
    %v877 = vstv %s876
    %v878 = vmul.f32 %v538, %v877
    %v879 = vmul.f32 %v539, %v877
    %v880 = vadd.f32 %v874, %v878
    %v881 = vadd.f32 %v875, %v879
    %s882 = sld [smem:[#allocation10 + $0x25]]
    %v883 = vstv %s882
    %v884 = vmul.f32 %v547, %v883
    %v885 = vmul.f32 %v548, %v883
    %v886 = vadd.f32 %v880, %v884
    %v887 = vadd.f32 %v881, %v885
    %s888 = sld [smem:[#allocation10 + $0x26]]
    %v889 = vstv %s888
    %v890 = vmul.f32 %v237, %v889
    %v891 = vmul.f32 %v238, %v889
    %v892 = vmul.f32 %v239, %v889
    %v893 = vmul.f32 %v240, %v889
    %v898 = vsel %vm275, %v892, %v890
    %v899 = vsel %vm275, %v893, %v891
    %v902 = vadd.f32 %v886, %v898
    %v903 = vadd.f32 %v887, %v899
    %s904 = sld [smem:[#allocation10 + $0x27]]
    %v905 = vstv %s904
    %v906 = vmul.f32 %v556, %v905
    %v907 = vmul.f32 %v557, %v905
    %v908 = vadd.f32 %v902, %v906
    %v909 = vadd.f32 %v903, %v907
    %s910 = sld [smem:[#allocation10 + $0x28]]
    %v911 = vstv %s910
    %v912 = vmul.f32 %v565, %v911
    %v913 = vmul.f32 %v566, %v911
    %v914 = vadd.f32 %v908, %v912
    %v915 = vadd.f32 %v909, %v913
    %s916 = sld [smem:[#allocation10 + $0x29]]
    %v917 = vstv %s916
    %v918 = vmul.f32 %v574, %v917
    %v919 = vmul.f32 %v575, %v917
    %v920 = vadd.f32 %v914, %v918
    %v921 = vadd.f32 %v915, %v919
    %922 = vrot.lane.b32.xlu0 %v920, 96
    %v923 = vpop.permute.xlu0 %922
    %924 = vrot.lane.b32.xlu0 %v921, 96
    %v925 = vpop.permute.xlu0 %924
    %vm926 = vcmp.lt.s32.totalorder %v254, 96
    %v927 = vsel %vm926, %v923, %v925
    %v928 = vsel %vm926, %v925, %v923
    %v929 = vsel %vm508, %v927, 0.0
    %v930 = vsel %vm509, %v928, 0.0
    %v931 = vadd.f32 %v870, %v929
    %v932 = vadd.f32 %v871, %v930
    %s933 = sld [smem:[#allocation10 + $0x2a]]
    %v934 = vstv %s933
    %v935 = vmul.f32 %v529, %v934
    %v936 = vmul.f32 %v530, %v934
    %s937 = sld [smem:[#allocation10 + $0x2b]]
    %v938 = vstv %s937
    %v939 = vmul.f32 %v538, %v938
    %v940 = vmul.f32 %v539, %v938
    %v941 = vadd.f32 %v935, %v939
    %v942 = vadd.f32 %v936, %v940
    %s943 = sld [smem:[#allocation10 + $0x2c]]
    %v944 = vstv %s943
    %v945 = vmul.f32 %v547, %v944
    %v946 = vmul.f32 %v548, %v944
    %v947 = vadd.f32 %v941, %v945
    %v948 = vadd.f32 %v942, %v946
    %s949 = sld [smem:[#allocation10 + $0x2d]]
    %v950 = vstv %s949
    %v951 = vmul.f32 %v237, %v950
    %v952 = vmul.f32 %v238, %v950
    %v953 = vmul.f32 %v239, %v950
    %v954 = vmul.f32 %v240, %v950
    %v959 = vsel %vm275, %v953, %v951
    %v960 = vsel %vm275, %v954, %v952
    %v963 = vadd.f32 %v947, %v959
    %v964 = vadd.f32 %v948, %v960
    %s965 = sld [smem:[#allocation10 + $0x2e]]
    %v966 = vstv %s965
    %v967 = vmul.f32 %v556, %v966
    %v968 = vmul.f32 %v557, %v966
    %v969 = vadd.f32 %v963, %v967
    %v970 = vadd.f32 %v964, %v968
    %s971 = sld [smem:[#allocation10 + $0x2f]]
    %v972 = vstv %s971
    %v973 = vmul.f32 %v565, %v972
    %v974 = vmul.f32 %v566, %v972
    %v975 = vadd.f32 %v969, %v973
    %v976 = vadd.f32 %v970, %v974
    %s977 = sld [smem:[#allocation10 + $0x30]]
    %v978 = vstv %s977
    %v979 = vmul.f32 %v574, %v978
    %v980 = vmul.f32 %v575, %v978
    %v981 = vadd.f32 %v975, %v979
    %v982 = vadd.f32 %v976, %v980
    %983 = vrot.lane.b32.xlu0 %v981, 80
    %v984 = vpop.permute.xlu0 %983
    %985 = vrot.lane.b32.xlu0 %v982, 80
    %v986 = vpop.permute.xlu0 %985
    %vm987 = vcmp.lt.s32.totalorder %v254, 80
    %v988 = vsel %vm987, %v984, %v986
    %v989 = vsel %vm987, %v986, %v984
    %v990 = vsel %vm510, %v988, 0.0
    %v991 = vsel %vm511, %v989, 0.0
    %v992 = vadd.f32 %v931, %v990
    %v993 = vadd.f32 %v932, %v991
    %v998 = vsel %vm275, %v247, %v245
    %v999 = vsel %vm275, %v248, %v246
    %1002 = vrot.lane.b32.xlu0 %v998, 3
    %v1003 = vpop.permute.xlu0 %1002
    %1004 = vrot.lane.b32.xlu0 %v999, 3
    %v1005 = vpop.permute.xlu0 %1004
    %v1006 = vsel %vm526, %v1003, %v1005
    %v1007 = vsel %vm526, %v1005, %v1003
    %v1008 = vsel %vm488, %v1007, 0.0
    %v1009 = vsel %vm489, %v1006, 0.0
    %1010 = vrot.lane.b32.xlu0 %v998, 2
    %v1011 = vpop.permute.xlu0 %1010
    %1012 = vrot.lane.b32.xlu0 %v999, 2
    %v1013 = vpop.permute.xlu0 %1012
    %v1014 = vsel %vm535, %v1011, %v1013
    %v1015 = vsel %vm535, %v1013, %v1011
    %v1016 = vsel %vm490, %v1015, 0.0
    %v1017 = vsel %vm491, %v1014, 0.0
    %1018 = vrot.lane.b32.xlu0 %v998, 1
    %v1019 = vpop.permute.xlu0 %1018
    %1020 = vrot.lane.b32.xlu0 %v999, 1
    %v1021 = vpop.permute.xlu0 %1020
    %v1022 = vsel %vm544, %v1019, %v1021
    %v1023 = vsel %vm544, %v1021, %v1019
    %v1024 = vsel %vm492, %v1023, 0.0
    %v1025 = vsel %vm493, %v1022, 0.0
    %1026 = vrot.lane.b32.xlu0 %v998, 127
    %v1027 = vpop.permute.xlu0 %1026
    %1028 = vrot.lane.b32.xlu0 %v999, 127
    %v1029 = vpop.permute.xlu0 %1028
    %v1030 = vsel %vm553, %v1027, %v1029
    %v1031 = vsel %vm553, %v1029, %v1027
    %v1032 = vsel %vm494, %v1030, 0.0
    %v1033 = vsel %vm495, %v1031, 0.0
    %1034 = vrot.lane.b32.xlu0 %v998, 126
    %v1035 = vpop.permute.xlu0 %1034
    %1036 = vrot.lane.b32.xlu0 %v999, 126
    %v1037 = vpop.permute.xlu0 %1036
    %v1038 = vsel %vm562, %v1035, %v1037
    %v1039 = vsel %vm562, %v1037, %v1035
    %v1040 = vsel %vm496, %v1038, 0.0
    %v1041 = vsel %vm497, %v1039, 0.0
    %1042 = vrot.lane.b32.xlu0 %v998, 125
    %v1043 = vpop.permute.xlu0 %1042
    %1044 = vrot.lane.b32.xlu0 %v999, 125
    %v1045 = vpop.permute.xlu0 %1044
    %v1046 = vsel %vm571, %v1043, %v1045
    %v1047 = vsel %vm571, %v1045, %v1043
    %v1048 = vsel %vm498, %v1046, 0.0
    %v1049 = vsel %vm499, %v1047, 0.0
    %s1050 = sld [smem:[#allocation10 + $0x31]]
    %v1051 = vstv %s1050
    %v1052 = vmul.f32 %v1008, %v1051
    %v1053 = vmul.f32 %v1009, %v1051
    %s1054 = sld [smem:[#allocation10 + $0x32]]
    %v1055 = vstv %s1054
    %v1056 = vmul.f32 %v1016, %v1055
    %v1057 = vmul.f32 %v1017, %v1055
    %v1058 = vadd.f32 %v1052, %v1056
    %v1059 = vadd.f32 %v1053, %v1057
    %s1060 = sld [smem:[#allocation10 + $0x33]]
    %v1061 = vstv %s1060
    %v1062 = vmul.f32 %v1024, %v1061
    %v1063 = vmul.f32 %v1025, %v1061
    %v1064 = vadd.f32 %v1058, %v1062
    %v1065 = vadd.f32 %v1059, %v1063
    %s1066 = sld [smem:[#allocation10 + $0x34]]
    %v1067 = vstv %s1066
    %v1068 = vmul.f32 %v245, %v1067
    %v1069 = vmul.f32 %v246, %v1067
    %v1070 = vmul.f32 %v247, %v1067
    %v1071 = vmul.f32 %v248, %v1067
    %v1076 = vsel %vm275, %v1070, %v1068
    %v1077 = vsel %vm275, %v1071, %v1069
    %v1080 = vadd.f32 %v1064, %v1076
    %v1081 = vadd.f32 %v1065, %v1077
    %s1082 = sld [smem:[#allocation10 + $0x35]]
    %v1083 = vstv %s1082
    %v1084 = vmul.f32 %v1032, %v1083
    %v1085 = vmul.f32 %v1033, %v1083
    %v1086 = vadd.f32 %v1080, %v1084
    %v1087 = vadd.f32 %v1081, %v1085
    %s1088 = sld [smem:[#allocation10 + $0x36]]
    %v1089 = vstv %s1088
    %v1090 = vmul.f32 %v1040, %v1089
    %v1091 = vmul.f32 %v1041, %v1089
    %v1092 = vadd.f32 %v1086, %v1090
    %v1093 = vadd.f32 %v1087, %v1091
    %s1094 = sld [smem:[#allocation10 + $0x37]]
    %v1095 = vstv %s1094
    %v1096 = vmul.f32 %v1048, %v1095
    %v1097 = vmul.f32 %v1049, %v1095
    %v1098 = vadd.f32 %v1092, %v1096
    %v1099 = vadd.f32 %v1093, %v1097
    %1100 = vrot.lane.b32.xlu0 %v1098, 48
    %v1101 = vpop.permute.xlu0 %1100
    %1102 = vrot.lane.b32.xlu0 %v1099, 48
    %v1103 = vpop.permute.xlu0 %1102
    %v1104 = vsel %vm630, %v1101, %v1103
    %v1105 = vsel %vm630, %v1103, %v1101
    %v1106 = vsel %vm500, %v1105, 0.0
    %v1107 = vsel %vm501, %v1104, 0.0
    %v1108 = vadd.f32 %v992, %v1106
    %v1109 = vadd.f32 %v993, %v1107
    %s1110 = sld [smem:[#allocation10 + $0x38]]
    %v1111 = vstv %s1110
    %v1112 = vmul.f32 %v1008, %v1111
    %v1113 = vmul.f32 %v1009, %v1111
    %s1114 = sld [smem:[#allocation10 + $0x39]]
    %v1115 = vstv %s1114
    %v1116 = vmul.f32 %v1016, %v1115
    %v1117 = vmul.f32 %v1017, %v1115
    %v1118 = vadd.f32 %v1112, %v1116
    %v1119 = vadd.f32 %v1113, %v1117
    %s1120 = sld [smem:[#allocation10 + $0x3a]]
    %v1121 = vstv %s1120
    %v1122 = vmul.f32 %v1024, %v1121
    %v1123 = vmul.f32 %v1025, %v1121
    %v1124 = vadd.f32 %v1118, %v1122
    %v1125 = vadd.f32 %v1119, %v1123
    %s1126 = sld [smem:[#allocation10 + $0x3b]]
    %v1127 = vstv %s1126
    %v1128 = vmul.f32 %v245, %v1127
    %v1129 = vmul.f32 %v246, %v1127
    %v1130 = vmul.f32 %v247, %v1127
    %v1131 = vmul.f32 %v248, %v1127
    %v1136 = vsel %vm275, %v1130, %v1128
    %v1137 = vsel %vm275, %v1131, %v1129
    %v1140 = vadd.f32 %v1124, %v1136
    %v1141 = vadd.f32 %v1125, %v1137
    %s1142 = sld [smem:[#allocation10 + $0x3c]]
    %v1143 = vstv %s1142
    %v1144 = vmul.f32 %v1032, %v1143
    %v1145 = vmul.f32 %v1033, %v1143
    %v1146 = vadd.f32 %v1140, %v1144
    %v1147 = vadd.f32 %v1141, %v1145
    %s1148 = sld [smem:[#allocation10 + $0x3d]]
    %v1149 = vstv %s1148
    %v1150 = vmul.f32 %v1040, %v1149
    %v1151 = vmul.f32 %v1041, %v1149
    %v1152 = vadd.f32 %v1146, %v1150
    %v1153 = vadd.f32 %v1147, %v1151
    %s1154 = sld [smem:[#allocation10 + $0x3e]]
    %v1155 = vstv %s1154
    %v1156 = vmul.f32 %v1048, %v1155
    %v1157 = vmul.f32 %v1049, %v1155
    %v1158 = vadd.f32 %v1152, %v1156
    %v1159 = vadd.f32 %v1153, %v1157
    %1160 = vrot.lane.b32.xlu0 %v1158, 32
    %v1161 = vpop.permute.xlu0 %1160
    %1162 = vrot.lane.b32.xlu0 %v1159, 32
    %v1163 = vpop.permute.xlu0 %1162
    %v1164 = vsel %vm691, %v1161, %v1163
    %v1165 = vsel %vm691, %v1163, %v1161
    %v1166 = vsel %vm502, %v1165, 0.0
    %v1167 = vsel %vm503, %v1164, 0.0
    %v1168 = vadd.f32 %v1108, %v1166
    %v1169 = vadd.f32 %v1109, %v1167
    %s1170 = sld [smem:[#allocation10 + $0x3f]]
    %v1171 = vstv %s1170
    %v1172 = vmul.f32 %v1008, %v1171
    %v1173 = vmul.f32 %v1009, %v1171
    %s1174 = sld [smem:[#allocation10 + $0x40]]
    %v1175 = vstv %s1174
    %v1176 = vmul.f32 %v1016, %v1175
    %v1177 = vmul.f32 %v1017, %v1175
    %v1178 = vadd.f32 %v1172, %v1176
    %v1179 = vadd.f32 %v1173, %v1177
    %s1180 = sld [smem:[#allocation10 + $0x41]]
    %v1181 = vstv %s1180
    %v1182 = vmul.f32 %v1024, %v1181
    %v1183 = vmul.f32 %v1025, %v1181
    %v1184 = vadd.f32 %v1178, %v1182
    %v1185 = vadd.f32 %v1179, %v1183
    %s1186 = sld [smem:[#allocation10 + $0x42]]
    %v1187 = vstv %s1186
    %v1188 = vmul.f32 %v245, %v1187
    %v1189 = vmul.f32 %v246, %v1187
    %v1190 = vmul.f32 %v247, %v1187
    %v1191 = vmul.f32 %v248, %v1187
    %v1196 = vsel %vm275, %v1190, %v1188
    %v1197 = vsel %vm275, %v1191, %v1189
    %v1200 = vadd.f32 %v1184, %v1196
    %v1201 = vadd.f32 %v1185, %v1197
    %s1202 = sld [smem:[#allocation10 + $0x43]]
    %v1203 = vstv %s1202
    %v1204 = vmul.f32 %v1032, %v1203
    %v1205 = vmul.f32 %v1033, %v1203
    %v1206 = vadd.f32 %v1200, %v1204
    %v1207 = vadd.f32 %v1201, %v1205
    %s1208 = sld [smem:[#allocation10 + $0x44]]
    %v1209 = vstv %s1208
    %v1210 = vmul.f32 %v1040, %v1209
    %v1211 = vmul.f32 %v1041, %v1209
    %v1212 = vadd.f32 %v1206, %v1210
    %v1213 = vadd.f32 %v1207, %v1211
    %s1214 = sld [smem:[#allocation10 + $0x45]]
    %v1215 = vstv %s1214
    %v1216 = vmul.f32 %v1048, %v1215
    %v1217 = vmul.f32 %v1049, %v1215
    %v1218 = vadd.f32 %v1212, %v1216
    %v1219 = vadd.f32 %v1213, %v1217
    %1220 = vrot.lane.b32.xlu0 %v1218, 16
    %v1221 = vpop.permute.xlu0 %1220
    %1222 = vrot.lane.b32.xlu0 %v1219, 16
    %v1223 = vpop.permute.xlu0 %1222
    %v1224 = vsel %vm752, %v1221, %v1223
    %v1225 = vsel %vm752, %v1223, %v1221
    %v1226 = vsel %vm504, %v1225, 0.0
    %v1227 = vsel %vm505, %v1224, 0.0
    %v1228 = vadd.f32 %v1168, %v1226
    %v1229 = vadd.f32 %v1169, %v1227
    %s1230 = sld [smem:[#allocation10 + $0x46]]
    %v1231 = vstv %s1230
    %v1232 = vmul.f32 %v1008, %v1231
    %v1233 = vmul.f32 %v1009, %v1231
    %s1234 = sld [smem:[#allocation10 + $0x47]]
    %v1235 = vstv %s1234
    %v1236 = vmul.f32 %v1016, %v1235
    %v1237 = vmul.f32 %v1017, %v1235
    %v1238 = vadd.f32 %v1232, %v1236
    %v1239 = vadd.f32 %v1233, %v1237
    %s1240 = sld [smem:[#allocation10 + $0x48]]
    %v1241 = vstv %s1240
    %v1242 = vmul.f32 %v1024, %v1241
    %v1243 = vmul.f32 %v1025, %v1241
    %v1244 = vadd.f32 %v1238, %v1242
    %v1245 = vadd.f32 %v1239, %v1243
    %s1246 = sld [smem:[#allocation10 + $0x49]]
    %v1247 = vstv %s1246
    %v1248 = vmul.f32 %v245, %v1247
    %v1249 = vmul.f32 %v246, %v1247
    %v1250 = vmul.f32 %v247, %v1247
    %v1251 = vmul.f32 %v248, %v1247
    %v1256 = vsel %vm275, %v1250, %v1248
    %v1257 = vsel %vm275, %v1251, %v1249
    %v1260 = vadd.f32 %v1244, %v1256
    %v1261 = vadd.f32 %v1245, %v1257
    %s1262 = sld [smem:[#allocation10 + $0x4a]]
    %v1263 = vstv %s1262
    %v1264 = vmul.f32 %v1032, %v1263
    %v1265 = vmul.f32 %v1033, %v1263
    %v1266 = vadd.f32 %v1260, %v1264
    %v1267 = vadd.f32 %v1261, %v1265
    %s1268 = sld [smem:[#allocation10 + $0x4b]]
    %v1269 = vstv %s1268
    %v1270 = vmul.f32 %v1040, %v1269
    %v1271 = vmul.f32 %v1041, %v1269
    %v1272 = vadd.f32 %v1266, %v1270
    %v1273 = vadd.f32 %v1267, %v1271
    %s1274 = sld [smem:[#allocation10 + $0x4c]]
    %v1275 = vstv %s1274
    %v1276 = vmul.f32 %v1048, %v1275
    %v1277 = vmul.f32 %v1049, %v1275
    %v1278 = vadd.f32 %v1272, %v1276
    %v1279 = vadd.f32 %v1273, %v1277
    %v1280 = vadd.f32 %v1228, %v1278
    %v1281 = vadd.f32 %v1229, %v1279
    %s1282 = sld [smem:[#allocation10 + $0x4d]]
    %v1283 = vstv %s1282
    %v1284 = vmul.f32 %v1008, %v1283
    %v1285 = vmul.f32 %v1009, %v1283
    %s1286 = sld [smem:[#allocation10 + $0x4e]]
    %v1287 = vstv %s1286
    %v1288 = vmul.f32 %v1016, %v1287
    %v1289 = vmul.f32 %v1017, %v1287
    %v1290 = vadd.f32 %v1284, %v1288
    %v1291 = vadd.f32 %v1285, %v1289
    %s1292 = sld [smem:[#allocation10 + $0x4f]]
    %v1293 = vstv %s1292
    %v1294 = vmul.f32 %v1024, %v1293
    %v1295 = vmul.f32 %v1025, %v1293
    %v1296 = vadd.f32 %v1290, %v1294
    %v1297 = vadd.f32 %v1291, %v1295
    %s1298 = sld [smem:[#allocation10 + $0x50]]
    %v1299 = vstv %s1298
    %v1300 = vmul.f32 %v245, %v1299
    %v1301 = vmul.f32 %v246, %v1299
    %v1302 = vmul.f32 %v247, %v1299
    %v1303 = vmul.f32 %v248, %v1299
    %v1308 = vsel %vm275, %v1302, %v1300
    %v1309 = vsel %vm275, %v1303, %v1301
    %v1312 = vadd.f32 %v1296, %v1308
    %v1313 = vadd.f32 %v1297, %v1309
    %s1314 = sld [smem:[#allocation10 + $0x51]]
    %v1315 = vstv %s1314
    %v1316 = vmul.f32 %v1032, %v1315
    %v1317 = vmul.f32 %v1033, %v1315
    %v1318 = vadd.f32 %v1312, %v1316
    %v1319 = vadd.f32 %v1313, %v1317
    %s1320 = sld [smem:[#allocation10 + $0x52]]
    %v1321 = vstv %s1320
    %v1322 = vmul.f32 %v1040, %v1321
    %v1323 = vmul.f32 %v1041, %v1321
    %v1324 = vadd.f32 %v1318, %v1322
    %v1325 = vadd.f32 %v1319, %v1323
    %s1326 = sld [smem:[#allocation10 + $0x53]]
    %v1327 = vstv %s1326
    %v1328 = vmul.f32 %v1048, %v1327
    %v1329 = vmul.f32 %v1049, %v1327
    %v1330 = vadd.f32 %v1324, %v1328
    %v1331 = vadd.f32 %v1325, %v1329
    %1332 = vrot.lane.b32.xlu0 %v1330, 112
    %v1333 = vpop.permute.xlu0 %1332
    %1334 = vrot.lane.b32.xlu0 %v1331, 112
    %v1335 = vpop.permute.xlu0 %1334
    %v1336 = vsel %vm865, %v1333, %v1335
    %v1337 = vsel %vm865, %v1335, %v1333
    %v1338 = vsel %vm506, %v1336, 0.0
    %v1339 = vsel %vm507, %v1337, 0.0
    %v1340 = vadd.f32 %v1280, %v1338
    %v1341 = vadd.f32 %v1281, %v1339
    %s1342 = sld [smem:[#allocation10 + $0x54]]
    %v1343 = vstv %s1342
    %v1344 = vmul.f32 %v1008, %v1343
    %v1345 = vmul.f32 %v1009, %v1343
    %s1346 = sld [smem:[#allocation10 + $0x55]]
    %v1347 = vstv %s1346
    %v1348 = vmul.f32 %v1016, %v1347
    %v1349 = vmul.f32 %v1017, %v1347
    %v1350 = vadd.f32 %v1344, %v1348
    %v1351 = vadd.f32 %v1345, %v1349
    %s1352 = sld [smem:[#allocation10 + $0x56]]
    %v1353 = vstv %s1352
    %v1354 = vmul.f32 %v1024, %v1353
    %v1355 = vmul.f32 %v1025, %v1353
    %v1356 = vadd.f32 %v1350, %v1354
    %v1357 = vadd.f32 %v1351, %v1355
    %s1358 = sld [smem:[#allocation10 + $0x57]]
    %v1359 = vstv %s1358
    %v1360 = vmul.f32 %v245, %v1359
    %v1361 = vmul.f32 %v246, %v1359
    %v1362 = vmul.f32 %v247, %v1359
    %v1363 = vmul.f32 %v248, %v1359
    %v1368 = vsel %vm275, %v1362, %v1360
    %v1369 = vsel %vm275, %v1363, %v1361
    %v1372 = vadd.f32 %v1356, %v1368
    %v1373 = vadd.f32 %v1357, %v1369
    %s1374 = sld [smem:[#allocation10 + $0x58]]
    %v1375 = vstv %s1374
    %v1376 = vmul.f32 %v1032, %v1375
    %v1377 = vmul.f32 %v1033, %v1375
    %v1378 = vadd.f32 %v1372, %v1376
    %v1379 = vadd.f32 %v1373, %v1377
    %s1380 = sld [smem:[#allocation10 + $0x59]]
    %v1381 = vstv %s1380
    %v1382 = vmul.f32 %v1040, %v1381
    %v1383 = vmul.f32 %v1041, %v1381
    %v1384 = vadd.f32 %v1378, %v1382
    %v1385 = vadd.f32 %v1379, %v1383
    %s1386 = sld [smem:[#allocation10 + $0x5a]]
    %v1387 = vstv %s1386
    %v1388 = vmul.f32 %v1048, %v1387
    %v1389 = vmul.f32 %v1049, %v1387
    %v1390 = vadd.f32 %v1384, %v1388
    %v1391 = vadd.f32 %v1385, %v1389
    %1392 = vrot.lane.b32.xlu0 %v1390, 96
    %v1393 = vpop.permute.xlu0 %1392
    %1394 = vrot.lane.b32.xlu0 %v1391, 96
    %v1395 = vpop.permute.xlu0 %1394
    %v1396 = vsel %vm926, %v1393, %v1395
    %v1397 = vsel %vm926, %v1395, %v1393
    %v1398 = vsel %vm508, %v1396, 0.0
    %v1399 = vsel %vm509, %v1397, 0.0
    %v1400 = vadd.f32 %v1340, %v1398
    %v1401 = vadd.f32 %v1341, %v1399
    %s1402 = sld [smem:[#allocation10 + $0x5b]]
    %v1403 = vstv %s1402
    %v1404 = vmul.f32 %v1008, %v1403
    %v1405 = vmul.f32 %v1009, %v1403
    %s1406 = sld [smem:[#allocation10 + $0x5c]]
    %v1407 = vstv %s1406
    %v1408 = vmul.f32 %v1016, %v1407
    %v1409 = vmul.f32 %v1017, %v1407
    %v1410 = vadd.f32 %v1404, %v1408
    %v1411 = vadd.f32 %v1405, %v1409
    %s1412 = sld [smem:[#allocation10 + $0x5d]]
    %v1413 = vstv %s1412
    %v1414 = vmul.f32 %v1024, %v1413
    %v1415 = vmul.f32 %v1025, %v1413
    %v1416 = vadd.f32 %v1410, %v1414
    %v1417 = vadd.f32 %v1411, %v1415
    %s1418 = sld [smem:[#allocation10 + $0x5e]]
    %v1419 = vstv %s1418
    %v1420 = vmul.f32 %v245, %v1419
    %v1421 = vmul.f32 %v246, %v1419
    %v1422 = vmul.f32 %v247, %v1419
    %v1423 = vmul.f32 %v248, %v1419
    %v1428 = vsel %vm275, %v1422, %v1420
    %v1429 = vsel %vm275, %v1423, %v1421
    %v1432 = vadd.f32 %v1416, %v1428
    %v1433 = vadd.f32 %v1417, %v1429
    %s1434 = sld [smem:[#allocation10 + $0x5f]]
    %v1435 = vstv %s1434
    %v1436 = vmul.f32 %v1032, %v1435
    %v1437 = vmul.f32 %v1033, %v1435
    %v1438 = vadd.f32 %v1432, %v1436
    %v1439 = vadd.f32 %v1433, %v1437
    %s1440 = sld [smem:[#allocation10 + $0x60]]
    %v1441 = vstv %s1440
    %v1442 = vmul.f32 %v1040, %v1441
    %v1443 = vmul.f32 %v1041, %v1441
    %v1444 = vadd.f32 %v1438, %v1442
    %v1445 = vadd.f32 %v1439, %v1443
    %s1446 = sld [smem:[#allocation10 + $0x61]]
    %v1447 = vstv %s1446
    %v1448 = vmul.f32 %v1048, %v1447
    %v1449 = vmul.f32 %v1049, %v1447
    %v1450 = vadd.f32 %v1444, %v1448
    %v1451 = vadd.f32 %v1445, %v1449
    %1452 = vrot.lane.b32.xlu0 %v1450, 80
    %v1453 = vpop.permute.xlu0 %1452
    %1454 = vrot.lane.b32.xlu0 %v1451, 80
    %v1455 = vpop.permute.xlu0 %1454
    %v1456 = vsel %vm987, %v1453, %v1455
    %v1457 = vsel %vm987, %v1455, %v1453
    %v1458 = vsel %vm510, %v1456, 0.0
    %v1459 = vsel %vm511, %v1457, 0.0
    %v1460 = vadd.f32 %v1400, %v1458
    %v1461 = vadd.f32 %v1401, %v1459
    %v1462 = vxor.u32 %v1460, 2147483648
    %v1463 = vxor.u32 %v1461, 2147483648
    %v1464 = vmul.f32 %v1462, 1.442695
    %v1465 = vpow.pop %v1464
    %v1466 = vmul.f32 %v1463, 1.442695
    %v1467 = vpow.pop %v1466
    %v1468 = vadd.f32 %v1465, 1.0
    %v1469 = vadd.f32 %v1467, 1.0
    %v1470 = vrcp.pop %v1468
    %v1471 = vmul.f32 1.0, %v1470
    %v1472 = vrcp.pop %v1469
    %v1473 = vmul.f32 1.0, %v1472
    %s1474 = sld [smem:[#allocation3]]
    %v1475 = vstv %s1474
    %v1476 = vmul.f32 %v1475, %v484
    %v1477 = vlaneseq
    %v1478 = vshrl.u32 %v1477, 7
    %v1479 = vsub.s32 0, %v1478
    %v1480 = vrot.slane %v1476, %v1479
    %1482 = vbcast.lane.b32.xlu0 %v1480, 256
    %v1483 = vpop.permute.xlu0 %1482
    %s1485 = sor.u32 256, 8
    %1486 = vbcast.lane.b32.xlu0 %v1480, %s1485
    %v1487 = vpop.permute.xlu0 %1486
    %v1488 = vlaneseq
    %v1489 = vshrl.u32 %v1488, 7
    %v1490 = vsub.s32 1, %v1489
    %v1491 = vrot.slane %v1476, %v1490
    %1493 = vbcast.lane.b32.xlu0 %v1491, 256
    %v1494 = vpop.permute.xlu0 %1493
    %s1496 = sor.u32 256, 8
    %1497 = vbcast.lane.b32.xlu0 %v1491, %s1496
    %v1498 = vpop.permute.xlu0 %1497
    %v1501 = vcombine.low %v1471, %v1473
    %v1503 = vunpack.c.l.s4 1966171168
    %v1504 = vunpack.c.0.s8 %v1503
    %v1505 = vlaneseq
    %v1506 = vshrl.u32 %v1505, 7
    %v1507 = vsub.s32 %v1504, %v1506
    %v1508 = vrot.slane %v1501, %v1507
    %v1509 = vcombine.high %v1508, %v1508
    %v1511 = vunpack.c.l.s4 1966171168
    %v1512 = vunpack.c.0.s8 %v1511
    %v1513 = vlaneseq
    %v1514 = vshrl.u32 %v1513, 7
    %v1515 = vsub.s32 %v1512, %v1514
    %v1516 = vrot.slane %v1508, %v1515
    %v1518 = vunpack.c.l.s4 1966171168
    %v1519 = vunpack.c.0.s8 %v1518
    %v1520 = vlaneseq
    %v1521 = vshrl.u32 %v1520, 7
    %v1522 = vsub.s32 %v1519, %v1521
    %v1523 = vrot.slane %v1509, %v1522
    %v1524 = vlaneseq
    %v1525 = vshrl.u32 %v1524, 7
    %v1526 = vsub.s32 0, %v1525
    %v1527 = vrot.slane %v1516, %v1526
    %v1528 = vlaneseq
    %v1529 = vshrl.u32 %v1528, 7
    %v1530 = vsub.s32 1, %v1529
    %v1531 = vrot.slane %v1516, %v1530
    %v1532 = vlaneseq
    %v1533 = vshrl.u32 %v1532, 7
    %v1534 = vsub.s32 0, %v1533
    %v1535 = vrot.slane %v1523, %v1534
    %v1536 = vlaneseq
    %v1537 = vshrl.u32 %v1536, 7
    %v1538 = vsub.s32 1, %v1537
    %v1539 = vrot.slane %v1523, %v1538
    %v1544 = vmul.f32 %v1483, %v1527
    %v1545 = vmul.f32 %v1483, %v1531
    %v1546 = vmul.f32 %v1487, %v1527
    %v1547 = vmul.f32 %v1487, %v1531
    %v1548 = vmul.f32 %v1494, %v1535
    %v1549 = vmul.f32 %v1494, %v1539
    %v1550 = vmul.f32 %v1498, %v1535
    %v1551 = vmul.f32 %v1498, %v1539
    %v1552 = vmul.f32 %v1544, %v157
    %v1553 = vmul.f32 %v1545, %v158
    %v1554 = vmul.f32 %v1546, %v159
    %v1555 = vmul.f32 %v1547, %v160
    %v1556 = vmul.f32 %v1548, %v161
    %v1557 = vmul.f32 %v1549, %v162
    %v1558 = vmul.f32 %v1550, %v163
    %v1559 = vmul.f32 %v1551, %v164
    %v1560 = vadd.f32 %v76, %v1552
    %v1561 = vadd.f32 %v77, %v1553
    %v1562 = vadd.f32 %v78, %v1554
    %v1563 = vadd.f32 %v79, %v1555
    %v1564 = vadd.f32 %v80, %v1556
    %v1565 = vadd.f32 %v81, %v1557
    %v1566 = vadd.f32 %v82, %v1558
    %v1567 = vadd.f32 %v83, %v1559
    %1568 = vst [vmem:[#allocation11] sm:$0xff] %v1560
    %1569 = vst [vmem:[#allocation11 + $0x8] sm:$0xff] %v1561
    %1570 = vst [vmem:[#allocation11 + $0x10] sm:$0xff] %v1562
    %1571 = vst [vmem:[#allocation11 + $0x18] sm:$0xff] %v1563
    %1572 = vst [vmem:[#allocation11 + $0x20] sm:$0xff] %v1564
    %1573 = vst [vmem:[#allocation11 + $0x28] sm:$0xff] %v1565
    %1574 = vst [vmem:[#allocation11 + $0x30] sm:$0xff] %v1566
    %1575 = vst [vmem:[#allocation11 + $0x38] sm:$0xff] %v1567
    // Predicated region
    $region50: #{tpu_custom_call.1} parent=1 // pred_check
      _
    $region51: #{tpu_custom_call.1} parent=1 // pred_check_branch
      %1577 = sbr.rel (0) target = $region53
    $region52: #{tpu_custom_call.1} parent=1 // pred_region
      %s1579 = ssub.s32 1024, 1024
      %1580 = vsyncadd [#allocation6], %s1579
      %s1581 = sshll.u32 [#allocation11], 4
      %s1582 = int_to_ptr.vmem [resolvable:$true] %s1581
      %1587 = dma.vmem_to_hbm [thread:$0]  %s1582, 1024, %s9, [#allocation6], 256, 256, 16
    $region53: #{tpu_custom_call.1} parent=1 // pred_fallthru
      _
    // Predicated region
    $region54: #{tpu_custom_call.1} parent=1 // pred_check
      _
    $region55: #{tpu_custom_call.1} parent=1 // pred_check_branch
      %1589 = sbr.rel (0) target = $region57
    $region56: #{tpu_custom_call.1} parent=1 // pred_region
      %1590 = dma.done [#allocation6], 1024
    $region57: #{tpu_custom_call.1} parent=1 // pred_fallthru
      _
    %1591 = vsyncpa [#allocation5], 1
    %1592 = vsyncpa [#allocation9], 1
    %1593 = vsyncpa [#allocation6], 1
    %1594 = vsyncpa [#allocation7], 1

</llo_original>
